<compile_context>
chip_gen: v6e
topology: v6e:2x2x1
jax: 0.10.0
libtpu: 0.0.40
codegen_flags: <defaults>
</compile_context>

<pallas_src>
import functools

import jax
import jax.numpy as jnp
from jax.experimental import pallas as pl
from jax.experimental.pallas import tpu as pltpu


# ----------------------------------------------------------------------------
# Fused kernel: entire forward pass for one sample per grid step.
# ----------------------------------------------------------------------------
def _fused_kernel(x_ref, w1_ref, t1_ref, wb_ref, tb_ref,
                  wd1t_ref, bd1_ref, wd2t_ref, bd2_ref, wd3_ref, bd3_ref,
                  o_ref, col_ref, cols_ref, *, num_conv_layers):
    x = x_ref[0]                                    # (CinP, L) f32, channel-padded
    CinP, L = x.shape
    K1 = w1_ref.shape[1] // CinP
    Lc1 = L - K1 + 1

    # ---- conv_layer1 (valid, K=25) + BN + ReLU + maxpool(3,1) --------------
    # One im2col matmul with contraction CinP*K1 = 200.  Full 8-row,
    # sublane-tile-aligned stores; padded channels are zero in x itself, so no
    # scratch zero-fill is needed (every row is rewritten every grid step).
    for k in range(K1):                             # static unroll
        col_ref[CinP * k:CinP * (k + 1), :] = x[:, k:k + Lc1]
    y = jnp.dot(w1_ref[...], col_ref[...].astype(jnp.bfloat16),
                preferred_element_type=jnp.float32)               # (C, Lc1) f32
    y = jnp.maximum(y + t1_ref[...], 0.0)           # BN scale folded into weights
    y = jnp.maximum(jnp.maximum(y[:, :Lc1 - 2], y[:, 1:Lc1 - 1]), y[:, 2:Lc1])

    # ---- conv_block1 (K=3, padding=1) applied num_conv_layers times --------
    C = y.shape[0]
    wb = wb_ref[...]                                # (C, 3C) bf16, fetched once
    zero_col = jnp.zeros((C, 1), jnp.bfloat16)
    for _ in range(num_conv_layers):                # static unroll (shapes shrink)
        Lb = y.shape[1]
        y_bf = y.astype(jnp.bfloat16)
        # im2col block written directly into bf16 scratch: 3 row-block stores,
        # zero "same"-padding only touches the two boundary columns.
        cols_ref[0:C, 0:1] = zero_col               # tap k=0, output pos 0
        cols_ref[0:C, 1:Lb] = y_bf[:, 0:Lb - 1]
        cols_ref[C:2 * C, 0:Lb] = y_bf              # tap k=1
        cols_ref[2 * C:3 * C, 0:Lb - 1] = y_bf[:, 1:Lb]
        cols_ref[2 * C:3 * C, Lb - 1:Lb] = zero_col  # tap k=2, output pos Lb-1
        z = jnp.dot(wb, cols_ref[:, 0:Lb],
                    preferred_element_type=jnp.float32)           # (C, Lb)
        z = jnp.maximum(z + tb_ref[...], 0.0)
        y = jnp.maximum(jnp.maximum(z[:, :Lb - 2], z[:, 1:Lb - 1]), z[:, 2:Lb])

    # ---- global max-pool + dense head (lane-dense row-vector form) ---------
    feat = jnp.max(y, axis=1, keepdims=True)                          # (C, 1) f32
    # dense layer 1: contraction 64, M=1 -> VPU multiply + sublane reduce (f32)
    h = jnp.sum(feat * wd1t_ref[...], axis=0, keepdims=True)          # (1, 256)
    h = jnp.maximum(h + bd1_ref[...], 0.0)
    # dense layer 2: contraction 256 -> bf16 MXU matmul, lane-dense result
    h = jnp.dot(h.astype(jnp.bfloat16), wd2t_ref[...],
                preferred_element_type=jnp.float32)                   # (1, 256)
    h = jnp.maximum(h + bd2_ref[...], 0.0)
    # linear_no_logit (n_classes=1): VPU multiply-reduce, no f32 MXU dot
    logit = jnp.sum(wd3_ref[...] * h, axis=1, keepdims=True)          # (nc, 1)
    logit = logit.reshape(1, -1) + bd3_ref[...]                       # (1, nc)
    o_ref[0] = (1.0 / (1.0 + jnp.exp(-logit))).astype(o_ref.dtype)


def forward(params, x, num_conv_layers=2):
    p = params
    N, Cin, L = x.shape
    CinP = (Cin + 7) // 8 * 8
    # Zero-pad channels to a full sublane group so all im2col stores are
    # full-tile (removes masked 4-row stores and the per-step zero-fill).
    x = jnp.pad(x, ((0, 0), (0, CinP - Cin), (0, 0)))
    K1 = p["w1"].shape[1] // CinP
    Lc1 = L - K1 + 1
    C = p["wb"].shape[0]
    n_classes = p["wd3"].shape[0]

    const2 = lambda n: (0, 0)
    out = pl.pallas_call(
        functools.partial(_fused_kernel, num_conv_layers=num_conv_layers),
        out_shape=jax.ShapeDtypeStruct((N, 1, n_classes), jnp.float32),
        grid=(N,),
        in_specs=[
            pl.BlockSpec((1, CinP, L), lambda n: (n, 0, 0)),
            pl.BlockSpec(p["w1"].shape, const2),
            pl.BlockSpec(p["t1"].shape, const2),
            pl.BlockSpec(p["wb"].shape, const2),
            pl.BlockSpec(p["tb"].shape, const2),
            pl.BlockSpec(p["wd1t"].shape, const2),
            pl.BlockSpec(p["bd1"].shape, const2),
            pl.BlockSpec(p["wd2t"].shape, const2),
            pl.BlockSpec(p["bd2"].shape, const2),
            pl.BlockSpec(p["wd3"].shape, const2),
            pl.BlockSpec(p["bd3"].shape, const2),
        ],
        out_specs=pl.BlockSpec((1, 1, n_classes), lambda n: (n, 0, 0)),
        scratch_shapes=[
            pltpu.VMEM((CinP * K1, Lc1), jnp.float32),     # conv1 im2col (200, 40)
            pltpu.VMEM((3 * C, Lc1 - 2), jnp.bfloat16),    # conv_block im2col (192, 38)
        ],
        compiler_params=pltpu.CompilerParams(
            dimension_semantics=("parallel",)),            # one sample per TC on v7x
    )(x, p["w1"], p["t1"], p["wb"], p["tb"],
      p["wd1t"], p["bd1"], p["wd2t"], p["bd2"], p["wd3"], p["bd3"])
    return out.reshape(N, n_classes)


# ----------------------------------------------------------------------------
# Synthetic module parameters (PyTorch layout) + host-side folding / reordering
# ----------------------------------------------------------------------------
def init_params(key, in_channels=4, n_classes=1, num_filters=64,
                filter_length=25, dense_width=256):
    ks = jax.random.split(key, 14)
    nrm = lambda k, shp, s=0.05: s * jax.random.normal(k, shp, jnp.float32)

    def bn(k, c):
        k1, k2, k3, k4 = jax.random.split(k, 4)
        return dict(gamma=1.0 + 0.1 * jax.random.normal(k1, (c,), jnp.float32),
                    beta=0.1 * jax.random.normal(k2, (c,), jnp.float32),
                    mean=0.1 * jax.random.normal(k3, (c,), jnp.float32),
                    var=1.0 + 0.1 * jnp.abs(jax.random.normal(k4, (c,), jnp.float32)))

    return {
        "conv1_w": nrm(ks[0], (num_filters, in_channels, filter_length)),
        "conv1_b": nrm(ks[1], (num_filters,)),
        "bn1": bn(ks[2], num_filters),
        "convb_w": nrm(ks[3], (num_filters, num_filters, 3)),
        "convb_b": nrm(ks[4], (num_filters,)),
        "bnb": bn(ks[5], num_filters),
        "fc1_w": nrm(ks[6], (dense_width, num_filters)),
        "fc1_b": nrm(ks[7], (dense_width,)),
        "bnd1": bn(ks[8], dense_width),
        "fc2_w": nrm(ks[9], (dense_width, dense_width)),
        "fc2_b": nrm(ks[10], (dense_width,)),
        "bnd2": bn(ks[11], dense_width),
        "fc3_w": nrm(ks[12], (n_classes, dense_width)),
        "fc3_b": nrm(ks[13], (n_classes,)),
    }


def prepare_params(raw, eps=1e-5):
    """Fold eval-mode BN (+ conv bias) into weights/shift; reorder for im2col."""
    def fold(b):
        s = b["gamma"] / jnp.sqrt(b["var"] + eps)
        return s, b["beta"] - b["mean"] * s

    p = {}
    # conv_layer1 + batch_norm: y = (s*W) (*) x + (s*b + t); channel pad to 8.
    w1, b1 = raw["conv1_w"], raw["conv1_b"]
    s, t = fold(raw["bn1"])
    F_, Cin, K1 = w1.shape
    CinP = (Cin + 7) // 8 * 8
    w1 = w1 * s[:, None, None]
    w1 = jnp.pad(w1, ((0, 0), (0, CinP - Cin), (0, 0)))
    p["w1"] = jnp.transpose(w1, (0, 2, 1)).reshape(F_, K1 * CinP).astype(jnp.bfloat16)
    p["t1"] = (s * b1 + t).reshape(-1, 1)
    # conv_block1 conv + BN, reordered k-major for the 3*C-deep im2col matmul.
    wb, bb = raw["convb_w"], raw["convb_b"]
    s, t = fold(raw["bnb"])
    wb = wb * s[:, None, None]
    p["wb"] = jnp.transpose(wb, (0, 2, 1)).reshape(F_, -1).astype(jnp.bfloat16)
    p["tb"] = (s * bb + t).reshape(-1, 1)
    # dense_block1: Linear+BN folded; transposed weights, row-vector biases.
    s, t = fold(raw["bnd1"])
    p["wd1t"] = (raw["fc1_w"] * s[:, None]).T            # (64, 256) f32 (VPU path)
    p["bd1"] = (raw["fc1_b"] * s + t).reshape(1, -1)     # (1, 256)
    s, t = fold(raw["bnd2"])
    p["wd2t"] = (raw["fc2_w"] * s[:, None]).T.astype(jnp.bfloat16)   # (256, 256)
    p["bd2"] = (raw["fc2_b"] * s + t).reshape(1, -1)     # (1, 256)
    # linear_no_logit kept f32: VPU multiply-reduce in the kernel.
    p["wd3"] = raw["fc3_w"]                              # (nc, 256)
    p["bd3"] = raw["fc3_b"].reshape(1, -1)               # (1, nc)
    return p


# ----------------------------------------------------------------------------
# Pure-JAX reference (PyTorch eval-mode semantics) for a sanity check
# ----------------------------------------------------------------------------
def reference_forward(raw, x, num_conv_layers=2, eps=1e-5):
    def bn(h, p):
        s = p["gamma"] / jnp.sqrt(p["var"] + eps)
        t = p["beta"] - p["mean"] * s
        if h.ndim == 3:
            return h * s[None, :, None] + t[None, :, None]
        return h * s[None, :] + t[None, :]

    def conv1d(h, w, b, padding):
        out = jax.lax.conv_general_dilated(
            h, w, window_strides=(1,), padding=[(padding, padding)],
            dimension_numbers=("NCH", "OIH", "NCH"))
        return out + b[None, :, None]

    def pool3(h):
        return jnp.maximum(jnp.maximum(h[..., :-2], h[..., 1:-1]), h[..., 2:])

    h = pool3(jax.nn.relu(bn(conv1d(x, raw["conv1_w"], raw["conv1_b"], 0), raw["bn1"])))
    for _ in range(num_conv_layers):
        h = pool3(jax.nn.relu(bn(conv1d(h, raw["convb_w"], raw["convb_b"], 1), raw["bnb"])))
    h = jnp.max(h, axis=-1)
    h = jax.nn.relu(bn(h @ raw["fc1_w"].T + raw["fc1_b"], raw["bnd1"]))
    h = jax.nn.relu(bn(h @ raw["fc2_w"].T + raw["fc2_b"], raw["bnd2"]))
    return jax.nn.sigmoid(h @ raw["fc3_w"].T + raw["fc3_b"])


if __name__ == "__main__":
    key = jax.random.PRNGKey(0)
    k_param, k_x = jax.random.split(key)
    raw = init_params(k_param)
    params = prepare_params(raw)
    # small input: batch=2, in_channels=4, seq_len=64  (NCL layout)
    x = jax.random.normal(k_x, (2, 4, 64), jnp.float32)

    out = jax.jit(forward)(params, x)
    out = jax.block_until_ready(out)
    assert out.shape == (2, 1)
    assert bool(jnp.all(jnp.isfinite(out)))

    # bf16 matmul operands => ~1e-2-level drift vs the f32 reference (intentional).
    ref = reference_forward(raw, x)
    err = float(jnp.max(jnp.abs(out - ref)))
    assert err < 3e-2, f"mismatch vs reference: {err}"
    print("KERNEL_OK")
</pallas_src>

<mosaic_0001>
module attributes {stable_mosaic.version = 11 : i64} {
  func.func @_fused_kernel(%arg0: i32, %arg1: memref<1x8x64xf32, #tpu.memory_space<vmem>>, %arg2: memref<64x200xbf16, #tpu.memory_space<vmem>>, %arg3: memref<64x1xf32, #tpu.memory_space<vmem>>, %arg4: memref<64x192xbf16, #tpu.memory_space<vmem>>, %arg5: memref<64x1xf32, #tpu.memory_space<vmem>>, %arg6: memref<64x256xf32, #tpu.memory_space<vmem>>, %arg7: memref<1x256xf32, #tpu.memory_space<vmem>>, %arg8: memref<256x256xbf16, #tpu.memory_space<vmem>>, %arg9: memref<1x256xf32, #tpu.memory_space<vmem>>, %arg10: memref<1x256xf32, #tpu.memory_space<vmem>>, %arg11: memref<1x1xf32, #tpu.memory_space<vmem>>, %arg12: memref<1x1x1xf32, #tpu.memory_space<vmem>>, %arg13: memref<200x40xf32, #tpu.memory_space<vmem>>, %arg14: memref<192x38xbf16, #tpu.memory_space<vmem>>) attributes {dimension_semantics = [#tpu.dimension_semantics<parallel>], iteration_bounds = array<i64: 2>, scalar_prefetch = 0 : i64, scratch_operands = 2 : i64, tpu.core_type = #tpu.core_type<tc>, window_params = [{transform_indices = @transform_0, window_bounds = array<i64: 1, 8, 64>}, {pipeline_mode = #tpu.pipeline_mode<synchronous>, transform_indices = @transform_1, window_bounds = array<i64: 64, 200>}, {pipeline_mode = #tpu.pipeline_mode<synchronous>, transform_indices = @transform_2, window_bounds = array<i64: 64, 1>}, {pipeline_mode = #tpu.pipeline_mode<synchronous>, transform_indices = @transform_3, window_bounds = array<i64: 64, 192>}, {pipeline_mode = #tpu.pipeline_mode<synchronous>, transform_indices = @transform_4, window_bounds = array<i64: 64, 1>}, {pipeline_mode = #tpu.pipeline_mode<synchronous>, transform_indices = @transform_5, window_bounds = array<i64: 64, 256>}, {pipeline_mode = #tpu.pipeline_mode<synchronous>, transform_indices = @transform_6, window_bounds = array<i64: 1, 256>}, {pipeline_mode = #tpu.pipeline_mode<synchronous>, transform_indices = @transform_7, window_bounds = array<i64: 256, 256>}, {pipeline_mode = #tpu.pipeline_mode<synchronous>, transform_indices = @transform_8, window_bounds = array<i64: 1, 256>}, {pipeline_mode = #tpu.pipeline_mode<synchronous>, transform_indices = @transform_9, window_bounds = array<i64: 1, 256>}, {pipeline_mode = #tpu.pipeline_mode<synchronous>, transform_indices = @transform_10, window_bounds = array<i64: 1, 1>}, {transform_indices = @transform_11, window_bounds = array<i64: 1, 1, 1>}]} {
    %c0 = arith.constant 0 : index
    %c0_0 = arith.constant 0 : index
    %c0_1 = arith.constant 0 : index
    %0 = vector.load %arg1[%c0, %c0_0, %c0_1] : memref<1x8x64xf32, #tpu.memory_space<vmem>>, vector<1x8x64xf32>
    %1 = vector.shape_cast %0 : vector<1x8x64xf32> to vector<8x64xf32>
    %2 = vector.extract_strided_slice %1 {offsets = [0, 0], sizes = [8, 40], strides = [1, 1]} : vector<8x64xf32> to vector<8x40xf32>
    %c0_2 = arith.constant 0 : index
    %c0_3 = arith.constant 0 : index
    %3 = vector.load %arg13[%c0_2, %c0_3] : memref<200x40xf32, #tpu.memory_space<vmem>>, vector<8x40xf32>
    tpu.vector_store %arg13[%c0_2, %c0_3], %2 {strides = array<i32>} : memref<200x40xf32, #tpu.memory_space<vmem>>, vector<8x40xf32>,
    %4 = vector.extract_strided_slice %1 {offsets = [0, 1], sizes = [8, 40], strides = [1, 1]} : vector<8x64xf32> to vector<8x40xf32>
    %c8 = arith.constant 8 : index
    %c0_4 = arith.constant 0 : index
    %5 = vector.load %arg13[%c8, %c0_4] : memref<200x40xf32, #tpu.memory_space<vmem>>, vector<8x40xf32>
    tpu.vector_store %arg13[%c8, %c0_4], %4 {strides = array<i32>} : memref<200x40xf32, #tpu.memory_space<vmem>>, vector<8x40xf32>,
    %6 = vector.extract_strided_slice %1 {offsets = [0, 2], sizes = [8, 40], strides = [1, 1]} : vector<8x64xf32> to vector<8x40xf32>
    %c16 = arith.constant 16 : index
    %c0_5 = arith.constant 0 : index
    %7 = vector.load %arg13[%c16, %c0_5] : memref<200x40xf32, #tpu.memory_space<vmem>>, vector<8x40xf32>
    tpu.vector_store %arg13[%c16, %c0_5], %6 {strides = array<i32>} : memref<200x40xf32, #tpu.memory_space<vmem>>, vector<8x40xf32>,
    %8 = vector.extract_strided_slice %1 {offsets = [0, 3], sizes = [8, 40], strides = [1, 1]} : vector<8x64xf32> to vector<8x40xf32>
    %c24 = arith.constant 24 : index
    %c0_6 = arith.constant 0 : index
    %9 = vector.load %arg13[%c24, %c0_6] : memref<200x40xf32, #tpu.memory_space<vmem>>, vector<8x40xf32>
    tpu.vector_store %arg13[%c24, %c0_6], %8 {strides = array<i32>} : memref<200x40xf32, #tpu.memory_space<vmem>>, vector<8x40xf32>,
    %10 = vector.extract_strided_slice %1 {offsets = [0, 4], sizes = [8, 40], strides = [1, 1]} : vector<8x64xf32> to vector<8x40xf32>
    %c32 = arith.constant 32 : index
    %c0_7 = arith.constant 0 : index
    %11 = vector.load %arg13[%c32, %c0_7] : memref<200x40xf32, #tpu.memory_space<vmem>>, vector<8x40xf32>
    tpu.vector_store %arg13[%c32, %c0_7], %10 {strides = array<i32>} : memref<200x40xf32, #tpu.memory_space<vmem>>, vector<8x40xf32>,
    %12 = vector.extract_strided_slice %1 {offsets = [0, 5], sizes = [8, 40], strides = [1, 1]} : vector<8x64xf32> to vector<8x40xf32>
    %c40 = arith.constant 40 : index
    %c0_8 = arith.constant 0 : index
    %13 = vector.load %arg13[%c40, %c0_8] : memref<200x40xf32, #tpu.memory_space<vmem>>, vector<8x40xf32>
    tpu.vector_store %arg13[%c40, %c0_8], %12 {strides = array<i32>} : memref<200x40xf32, #tpu.memory_space<vmem>>, vector<8x40xf32>,
    %14 = vector.extract_strided_slice %1 {offsets = [0, 6], sizes = [8, 40], strides = [1, 1]} : vector<8x64xf32> to vector<8x40xf32>
    %c48 = arith.constant 48 : index
    %c0_9 = arith.constant 0 : index
    %15 = vector.load %arg13[%c48, %c0_9] : memref<200x40xf32, #tpu.memory_space<vmem>>, vector<8x40xf32>
    tpu.vector_store %arg13[%c48, %c0_9], %14 {strides = array<i32>} : memref<200x40xf32, #tpu.memory_space<vmem>>, vector<8x40xf32>,
    %16 = vector.extract_strided_slice %1 {offsets = [0, 7], sizes = [8, 40], strides = [1, 1]} : vector<8x64xf32> to vector<8x40xf32>
    %c56 = arith.constant 56 : index
    %c0_10 = arith.constant 0 : index
    %17 = vector.load %arg13[%c56, %c0_10] : memref<200x40xf32, #tpu.memory_space<vmem>>, vector<8x40xf32>
    tpu.vector_store %arg13[%c56, %c0_10], %16 {strides = array<i32>} : memref<200x40xf32, #tpu.memory_space<vmem>>, vector<8x40xf32>,
    %18 = vector.extract_strided_slice %1 {offsets = [0, 8], sizes = [8, 40], strides = [1, 1]} : vector<8x64xf32> to vector<8x40xf32>
    %c64 = arith.constant 64 : index
    %c0_11 = arith.constant 0 : index
    %19 = vector.load %arg13[%c64, %c0_11] : memref<200x40xf32, #tpu.memory_space<vmem>>, vector<8x40xf32>
    tpu.vector_store %arg13[%c64, %c0_11], %18 {strides = array<i32>} : memref<200x40xf32, #tpu.memory_space<vmem>>, vector<8x40xf32>,
    %20 = vector.extract_strided_slice %1 {offsets = [0, 9], sizes = [8, 40], strides = [1, 1]} : vector<8x64xf32> to vector<8x40xf32>
    %c72 = arith.constant 72 : index
    %c0_12 = arith.constant 0 : index
    %21 = vector.load %arg13[%c72, %c0_12] : memref<200x40xf32, #tpu.memory_space<vmem>>, vector<8x40xf32>
    tpu.vector_store %arg13[%c72, %c0_12], %20 {strides = array<i32>} : memref<200x40xf32, #tpu.memory_space<vmem>>, vector<8x40xf32>,
    %22 = vector.extract_strided_slice %1 {offsets = [0, 10], sizes = [8, 40], strides = [1, 1]} : vector<8x64xf32> to vector<8x40xf32>
    %c80 = arith.constant 80 : index
    %c0_13 = arith.constant 0 : index
    %23 = vector.load %arg13[%c80, %c0_13] : memref<200x40xf32, #tpu.memory_space<vmem>>, vector<8x40xf32>
    tpu.vector_store %arg13[%c80, %c0_13], %22 {strides = array<i32>} : memref<200x40xf32, #tpu.memory_space<vmem>>, vector<8x40xf32>,
    %24 = vector.extract_strided_slice %1 {offsets = [0, 11], sizes = [8, 40], strides = [1, 1]} : vector<8x64xf32> to vector<8x40xf32>
    %c88 = arith.constant 88 : index
    %c0_14 = arith.constant 0 : index
    %25 = vector.load %arg13[%c88, %c0_14] : memref<200x40xf32, #tpu.memory_space<vmem>>, vector<8x40xf32>
    tpu.vector_store %arg13[%c88, %c0_14], %24 {strides = array<i32>} : memref<200x40xf32, #tpu.memory_space<vmem>>, vector<8x40xf32>,
    %26 = vector.extract_strided_slice %1 {offsets = [0, 12], sizes = [8, 40], strides = [1, 1]} : vector<8x64xf32> to vector<8x40xf32>
    %c96 = arith.constant 96 : index
    %c0_15 = arith.constant 0 : index
    %27 = vector.load %arg13[%c96, %c0_15] : memref<200x40xf32, #tpu.memory_space<vmem>>, vector<8x40xf32>
    tpu.vector_store %arg13[%c96, %c0_15], %26 {strides = array<i32>} : memref<200x40xf32, #tpu.memory_space<vmem>>, vector<8x40xf32>,
    %28 = vector.extract_strided_slice %1 {offsets = [0, 13], sizes = [8, 40], strides = [1, 1]} : vector<8x64xf32> to vector<8x40xf32>
    %c104 = arith.constant 104 : index
    %c0_16 = arith.constant 0 : index
    %29 = vector.load %arg13[%c104, %c0_16] : memref<200x40xf32, #tpu.memory_space<vmem>>, vector<8x40xf32>
    tpu.vector_store %arg13[%c104, %c0_16], %28 {strides = array<i32>} : memref<200x40xf32, #tpu.memory_space<vmem>>, vector<8x40xf32>,
    %30 = vector.extract_strided_slice %1 {offsets = [0, 14], sizes = [8, 40], strides = [1, 1]} : vector<8x64xf32> to vector<8x40xf32>
    %c112 = arith.constant 112 : index
    %c0_17 = arith.constant 0 : index
    %31 = vector.load %arg13[%c112, %c0_17] : memref<200x40xf32, #tpu.memory_space<vmem>>, vector<8x40xf32>
    tpu.vector_store %arg13[%c112, %c0_17], %30 {strides = array<i32>} : memref<200x40xf32, #tpu.memory_space<vmem>>, vector<8x40xf32>,
    %32 = vector.extract_strided_slice %1 {offsets = [0, 15], sizes = [8, 40], strides = [1, 1]} : vector<8x64xf32> to vector<8x40xf32>
    %c120 = arith.constant 120 : index
    %c0_18 = arith.constant 0 : index
    %33 = vector.load %arg13[%c120, %c0_18] : memref<200x40xf32, #tpu.memory_space<vmem>>, vector<8x40xf32>
    tpu.vector_store %arg13[%c120, %c0_18], %32 {strides = array<i32>} : memref<200x40xf32, #tpu.memory_space<vmem>>, vector<8x40xf32>,
    %34 = vector.extract_strided_slice %1 {offsets = [0, 16], sizes = [8, 40], strides = [1, 1]} : vector<8x64xf32> to vector<8x40xf32>
    %c128 = arith.constant 128 : index
    %c0_19 = arith.constant 0 : index
    %35 = vector.load %arg13[%c128, %c0_19] : memref<200x40xf32, #tpu.memory_space<vmem>>, vector<8x40xf32>
    tpu.vector_store %arg13[%c128, %c0_19], %34 {strides = array<i32>} : memref<200x40xf32, #tpu.memory_space<vmem>>, vector<8x40xf32>,
    %36 = vector.extract_strided_slice %1 {offsets = [0, 17], sizes = [8, 40], strides = [1, 1]} : vector<8x64xf32> to vector<8x40xf32>
    %c136 = arith.constant 136 : index
    %c0_20 = arith.constant 0 : index
    %37 = vector.load %arg13[%c136, %c0_20] : memref<200x40xf32, #tpu.memory_space<vmem>>, vector<8x40xf32>
    tpu.vector_store %arg13[%c136, %c0_20], %36 {strides = array<i32>} : memref<200x40xf32, #tpu.memory_space<vmem>>, vector<8x40xf32>,
    %38 = vector.extract_strided_slice %1 {offsets = [0, 18], sizes = [8, 40], strides = [1, 1]} : vector<8x64xf32> to vector<8x40xf32>
    %c144 = arith.constant 144 : index
    %c0_21 = arith.constant 0 : index
    %39 = vector.load %arg13[%c144, %c0_21] : memref<200x40xf32, #tpu.memory_space<vmem>>, vector<8x40xf32>
    tpu.vector_store %arg13[%c144, %c0_21], %38 {strides = array<i32>} : memref<200x40xf32, #tpu.memory_space<vmem>>, vector<8x40xf32>,
    %40 = vector.extract_strided_slice %1 {offsets = [0, 19], sizes = [8, 40], strides = [1, 1]} : vector<8x64xf32> to vector<8x40xf32>
    %c152 = arith.constant 152 : index
    %c0_22 = arith.constant 0 : index
    %41 = vector.load %arg13[%c152, %c0_22] : memref<200x40xf32, #tpu.memory_space<vmem>>, vector<8x40xf32>
    tpu.vector_store %arg13[%c152, %c0_22], %40 {strides = array<i32>} : memref<200x40xf32, #tpu.memory_space<vmem>>, vector<8x40xf32>,
    %42 = vector.extract_strided_slice %1 {offsets = [0, 20], sizes = [8, 40], strides = [1, 1]} : vector<8x64xf32> to vector<8x40xf32>
    %c160 = arith.constant 160 : index
    %c0_23 = arith.constant 0 : index
    %43 = vector.load %arg13[%c160, %c0_23] : memref<200x40xf32, #tpu.memory_space<vmem>>, vector<8x40xf32>
    tpu.vector_store %arg13[%c160, %c0_23], %42 {strides = array<i32>} : memref<200x40xf32, #tpu.memory_space<vmem>>, vector<8x40xf32>,
    %44 = vector.extract_strided_slice %1 {offsets = [0, 21], sizes = [8, 40], strides = [1, 1]} : vector<8x64xf32> to vector<8x40xf32>
    %c168 = arith.constant 168 : index
    %c0_24 = arith.constant 0 : index
    %45 = vector.load %arg13[%c168, %c0_24] : memref<200x40xf32, #tpu.memory_space<vmem>>, vector<8x40xf32>
    tpu.vector_store %arg13[%c168, %c0_24], %44 {strides = array<i32>} : memref<200x40xf32, #tpu.memory_space<vmem>>, vector<8x40xf32>,
    %46 = vector.extract_strided_slice %1 {offsets = [0, 22], sizes = [8, 40], strides = [1, 1]} : vector<8x64xf32> to vector<8x40xf32>
    %c176 = arith.constant 176 : index
    %c0_25 = arith.constant 0 : index
    %47 = vector.load %arg13[%c176, %c0_25] : memref<200x40xf32, #tpu.memory_space<vmem>>, vector<8x40xf32>
    tpu.vector_store %arg13[%c176, %c0_25], %46 {strides = array<i32>} : memref<200x40xf32, #tpu.memory_space<vmem>>, vector<8x40xf32>,
    %48 = vector.extract_strided_slice %1 {offsets = [0, 23], sizes = [8, 40], strides = [1, 1]} : vector<8x64xf32> to vector<8x40xf32>
    %c184 = arith.constant 184 : index
    %c0_26 = arith.constant 0 : index
    %49 = vector.load %arg13[%c184, %c0_26] : memref<200x40xf32, #tpu.memory_space<vmem>>, vector<8x40xf32>
    tpu.vector_store %arg13[%c184, %c0_26], %48 {strides = array<i32>} : memref<200x40xf32, #tpu.memory_space<vmem>>, vector<8x40xf32>,
    %50 = vector.extract_strided_slice %1 {offsets = [0, 24], sizes = [8, 40], strides = [1, 1]} : vector<8x64xf32> to vector<8x40xf32>
    %c192 = arith.constant 192 : index
    %c0_27 = arith.constant 0 : index
    %51 = vector.load %arg13[%c192, %c0_27] : memref<200x40xf32, #tpu.memory_space<vmem>>, vector<8x40xf32>
    tpu.vector_store %arg13[%c192, %c0_27], %50 {strides = array<i32>} : memref<200x40xf32, #tpu.memory_space<vmem>>, vector<8x40xf32>,
    %c0_28 = arith.constant 0 : index
    %c0_29 = arith.constant 0 : index
    %52 = vector.load %arg2[%c0_28, %c0_29] : memref<64x200xbf16, #tpu.memory_space<vmem>>, vector<64x200xbf16>
    %c0_30 = arith.constant 0 : index
    %c0_31 = arith.constant 0 : index
    %53 = vector.load %arg13[%c0_30, %c0_31] : memref<200x40xf32, #tpu.memory_space<vmem>>, vector<200x40xf32>
    %54 = arith.truncf %53 : vector<200x40xf32> to vector<200x40xbf16>
    %cst = arith.constant dense<0.000000e+00> : vector<64x40xf32>
    %55 = tpu.matmul %52, %54, %cst {dimension_numbers = #tpu.dot_dimension_numbers<[1], [0], [0], [1], [0, 0, 1, 1], [], []>} : vector<64x200xbf16>, vector<200x40xbf16>, vector<64x40xf32> -> vector<64x40xf32>
    %c0_32 = arith.constant 0 : index
    %c0_33 = arith.constant 0 : index
    %56 = vector.load %arg3[%c0_32, %c0_33] : memref<64x1xf32, #tpu.memory_space<vmem>>, vector<64x1xf32>
    %57 = vector.broadcast %56 : vector<64x1xf32> to vector<64x40xf32>
    %58 = arith.addf %55, %57 : vector<64x40xf32>
    %cst_34 = arith.constant 0.000000e+00 : f32
    %59 = vector.broadcast %cst_34 : f32 to vector<64x40xf32>
    %60 = arith.maximumf %58, %59 : vector<64x40xf32>
    %61 = vector.extract_strided_slice %60 {offsets = [0, 0], sizes = [64, 38], strides = [1, 1]} : vector<64x40xf32> to vector<64x38xf32>
    %62 = vector.extract_strided_slice %60 {offsets = [0, 1], sizes = [64, 38], strides = [1, 1]} : vector<64x40xf32> to vector<64x38xf32>
    %63 = arith.maximumf %61, %62 : vector<64x38xf32>
    %64 = vector.extract_strided_slice %60 {offsets = [0, 2], sizes = [64, 38], strides = [1, 1]} : vector<64x40xf32> to vector<64x38xf32>
    %65 = arith.maximumf %63, %64 : vector<64x38xf32>
    %c0_35 = arith.constant 0 : index
    %c0_36 = arith.constant 0 : index
    %66 = vector.load %arg4[%c0_35, %c0_36] : memref<64x192xbf16, #tpu.memory_space<vmem>>, vector<64x192xbf16>
    %cst_37 = arith.constant 0.000000e+00 : bf16
    %67 = vector.broadcast %cst_37 : bf16 to vector<64x1xbf16>
    %68 = arith.truncf %65 : vector<64x38xf32> to vector<64x38xbf16>
    %c0_38 = arith.constant 0 : index
    %c0_39 = arith.constant 0 : index
    %69 = vector.load %arg14[%c0_38, %c0_39] : memref<192x38xbf16, #tpu.memory_space<vmem>>, vector<64x1xbf16>
    tpu.vector_store %arg14[%c0_38, %c0_39], %67 {strides = array<i32>} : memref<192x38xbf16, #tpu.memory_space<vmem>>, vector<64x1xbf16>,
    %70 = vector.extract_strided_slice %68 {offsets = [0, 0], sizes = [64, 37], strides = [1, 1]} : vector<64x38xbf16> to vector<64x37xbf16>
    %c0_40 = arith.constant 0 : index
    %c1 = arith.constant 1 : index
    %71 = vector.load %arg14[%c0_40, %c1] : memref<192x38xbf16, #tpu.memory_space<vmem>>, vector<64x37xbf16>
    tpu.vector_store %arg14[%c0_40, %c1], %70 {strides = array<i32>} : memref<192x38xbf16, #tpu.memory_space<vmem>>, vector<64x37xbf16>,
    %c64_41 = arith.constant 64 : index
    %c0_42 = arith.constant 0 : index
    %72 = vector.load %arg14[%c64_41, %c0_42] : memref<192x38xbf16, #tpu.memory_space<vmem>>, vector<64x38xbf16>
    tpu.vector_store %arg14[%c64_41, %c0_42], %68 {strides = array<i32>} : memref<192x38xbf16, #tpu.memory_space<vmem>>, vector<64x38xbf16>,
    %73 = vector.extract_strided_slice %68 {offsets = [0, 1], sizes = [64, 37], strides = [1, 1]} : vector<64x38xbf16> to vector<64x37xbf16>
    %c128_43 = arith.constant 128 : index
    %c0_44 = arith.constant 0 : index
    %74 = vector.load %arg14[%c128_43, %c0_44] : memref<192x38xbf16, #tpu.memory_space<vmem>>, vector<64x37xbf16>
    tpu.vector_store %arg14[%c128_43, %c0_44], %73 {strides = array<i32>} : memref<192x38xbf16, #tpu.memory_space<vmem>>, vector<64x37xbf16>,
    %c128_45 = arith.constant 128 : index
    %c37 = arith.constant 37 : index
    %75 = vector.load %arg14[%c128_45, %c37] : memref<192x38xbf16, #tpu.memory_space<vmem>>, vector<64x1xbf16>
    tpu.vector_store %arg14[%c128_45, %c37], %67 {strides = array<i32>} : memref<192x38xbf16, #tpu.memory_space<vmem>>, vector<64x1xbf16>,
    %c0_46 = arith.constant 0 : index
    %c0_47 = arith.constant 0 : index
    %76 = vector.load %arg14[%c0_46, %c0_47] : memref<192x38xbf16, #tpu.memory_space<vmem>>, vector<192x38xbf16>
    %cst_48 = arith.constant dense<0.000000e+00> : vector<64x38xf32>
    %77 = tpu.matmul %66, %76, %cst_48 {dimension_numbers = #tpu.dot_dimension_numbers<[1], [0], [0], [1], [0, 0, 1, 1], [], []>} : vector<64x192xbf16>, vector<192x38xbf16>, vector<64x38xf32> -> vector<64x38xf32>
    %c0_49 = arith.constant 0 : index
    %c0_50 = arith.constant 0 : index
    %78 = vector.load %arg5[%c0_49, %c0_50] : memref<64x1xf32, #tpu.memory_space<vmem>>, vector<64x1xf32>
    %79 = vector.broadcast %78 : vector<64x1xf32> to vector<64x38xf32>
    %80 = arith.addf %77, %79 : vector<64x38xf32>
    %cst_51 = arith.constant 0.000000e+00 : f32
    %81 = vector.broadcast %cst_51 : f32 to vector<64x38xf32>
    %82 = arith.maximumf %80, %81 : vector<64x38xf32>
    %83 = vector.extract_strided_slice %82 {offsets = [0, 0], sizes = [64, 36], strides = [1, 1]} : vector<64x38xf32> to vector<64x36xf32>
    %84 = vector.extract_strided_slice %82 {offsets = [0, 1], sizes = [64, 36], strides = [1, 1]} : vector<64x38xf32> to vector<64x36xf32>
    %85 = arith.maximumf %83, %84 : vector<64x36xf32>
    %86 = vector.extract_strided_slice %82 {offsets = [0, 2], sizes = [64, 36], strides = [1, 1]} : vector<64x38xf32> to vector<64x36xf32>
    %87 = arith.maximumf %85, %86 : vector<64x36xf32>
    %88 = arith.truncf %87 : vector<64x36xf32> to vector<64x36xbf16>
    %c0_52 = arith.constant 0 : index
    %c0_53 = arith.constant 0 : index
    %89 = vector.load %arg14[%c0_52, %c0_53] : memref<192x38xbf16, #tpu.memory_space<vmem>>, vector<64x1xbf16>
    tpu.vector_store %arg14[%c0_52, %c0_53], %67 {strides = array<i32>} : memref<192x38xbf16, #tpu.memory_space<vmem>>, vector<64x1xbf16>,
    %90 = vector.extract_strided_slice %88 {offsets = [0, 0], sizes = [64, 35], strides = [1, 1]} : vector<64x36xbf16> to vector<64x35xbf16>
    %c0_54 = arith.constant 0 : index
    %c1_55 = arith.constant 1 : index
    %91 = vector.load %arg14[%c0_54, %c1_55] : memref<192x38xbf16, #tpu.memory_space<vmem>>, vector<64x35xbf16>
    tpu.vector_store %arg14[%c0_54, %c1_55], %90 {strides = array<i32>} : memref<192x38xbf16, #tpu.memory_space<vmem>>, vector<64x35xbf16>,
    %c64_56 = arith.constant 64 : index
    %c0_57 = arith.constant 0 : index
    %92 = vector.load %arg14[%c64_56, %c0_57] : memref<192x38xbf16, #tpu.memory_space<vmem>>, vector<64x36xbf16>
    tpu.vector_store %arg14[%c64_56, %c0_57], %88 {strides = array<i32>} : memref<192x38xbf16, #tpu.memory_space<vmem>>, vector<64x36xbf16>,
    %93 = vector.extract_strided_slice %88 {offsets = [0, 1], sizes = [64, 35], strides = [1, 1]} : vector<64x36xbf16> to vector<64x35xbf16>
    %c128_58 = arith.constant 128 : index
    %c0_59 = arith.constant 0 : index
    %94 = vector.load %arg14[%c128_58, %c0_59] : memref<192x38xbf16, #tpu.memory_space<vmem>>, vector<64x35xbf16>
    tpu.vector_store %arg14[%c128_58, %c0_59], %93 {strides = array<i32>} : memref<192x38xbf16, #tpu.memory_space<vmem>>, vector<64x35xbf16>,
    %c128_60 = arith.constant 128 : index
    %c35 = arith.constant 35 : index
    %95 = vector.load %arg14[%c128_60, %c35] : memref<192x38xbf16, #tpu.memory_space<vmem>>, vector<64x1xbf16>
    tpu.vector_store %arg14[%c128_60, %c35], %67 {strides = array<i32>} : memref<192x38xbf16, #tpu.memory_space<vmem>>, vector<64x1xbf16>,
    %c0_61 = arith.constant 0 : index
    %c0_62 = arith.constant 0 : index
    %96 = vector.load %arg14[%c0_61, %c0_62] : memref<192x38xbf16, #tpu.memory_space<vmem>>, vector<192x36xbf16>
    %cst_63 = arith.constant dense<0.000000e+00> : vector<64x36xf32>
    %97 = tpu.matmul %66, %96, %cst_63 {dimension_numbers = #tpu.dot_dimension_numbers<[1], [0], [0], [1], [0, 0, 1, 1], [], []>} : vector<64x192xbf16>, vector<192x36xbf16>, vector<64x36xf32> -> vector<64x36xf32>
    %c0_64 = arith.constant 0 : index
    %c0_65 = arith.constant 0 : index
    %98 = vector.load %arg5[%c0_64, %c0_65] : memref<64x1xf32, #tpu.memory_space<vmem>>, vector<64x1xf32>
    %99 = vector.broadcast %98 : vector<64x1xf32> to vector<64x36xf32>
    %100 = arith.addf %97, %99 : vector<64x36xf32>
    %cst_66 = arith.constant 0.000000e+00 : f32
    %101 = vector.broadcast %cst_66 : f32 to vector<64x36xf32>
    %102 = arith.maximumf %100, %101 : vector<64x36xf32>
    %103 = vector.extract_strided_slice %102 {offsets = [0, 0], sizes = [64, 34], strides = [1, 1]} : vector<64x36xf32> to vector<64x34xf32>
    %104 = vector.extract_strided_slice %102 {offsets = [0, 1], sizes = [64, 34], strides = [1, 1]} : vector<64x36xf32> to vector<64x34xf32>
    %105 = arith.maximumf %103, %104 : vector<64x34xf32>
    %106 = vector.extract_strided_slice %102 {offsets = [0, 2], sizes = [64, 34], strides = [1, 1]} : vector<64x36xf32> to vector<64x34xf32>
    %107 = arith.maximumf %105, %106 : vector<64x34xf32>
    %cst_67 = arith.constant dense<0xFF800000> : vector<64xf32>
    %108 = vector.multi_reduction <maximumf>, %107, %cst_67 [1] : vector<64x34xf32> to vector<64xf32>
    %109 = vector.shape_cast %108 : vector<64xf32> to vector<64x1xf32>
    %c0_68 = arith.constant 0 : index
    %c0_69 = arith.constant 0 : index
    %110 = vector.load %arg6[%c0_68, %c0_69] : memref<64x256xf32, #tpu.memory_space<vmem>>, vector<64x256xf32>
    %111 = vector.broadcast %109 : vector<64x1xf32> to vector<64x256xf32>
    %112 = arith.mulf %111, %110 : vector<64x256xf32>
    %cst_70 = arith.constant dense<0.000000e+00> : vector<256xf32>
    %113 = vector.multi_reduction <add>, %112, %cst_70 [0] : vector<64x256xf32> to vector<256xf32>
    %114 = vector.shape_cast %113 : vector<256xf32> to vector<1x256xf32>
    %c0_71 = arith.constant 0 : index
    %c0_72 = arith.constant 0 : index
    %115 = vector.load %arg7[%c0_71, %c0_72] : memref<1x256xf32, #tpu.memory_space<vmem>>, vector<1x256xf32>
    %116 = arith.addf %114, %115 : vector<1x256xf32>
    %cst_73 = arith.constant 0.000000e+00 : f32
    %117 = vector.broadcast %cst_73 : f32 to vector<1x256xf32>
    %118 = arith.maximumf %116, %117 : vector<1x256xf32>
    %119 = arith.truncf %118 : vector<1x256xf32> to vector<1x256xbf16>
    %c0_74 = arith.constant 0 : index
    %c0_75 = arith.constant 0 : index
    %120 = vector.load %arg8[%c0_74, %c0_75] : memref<256x256xbf16, #tpu.memory_space<vmem>>, vector<256x256xbf16>
    %cst_76 = arith.constant dense<0.000000e+00> : vector<1x256xf32>
    %121 = tpu.matmul %119, %120, %cst_76 {dimension_numbers = #tpu.dot_dimension_numbers<[1], [0], [0], [1], [0, 0, 1, 1], [], []>} : vector<1x256xbf16>, vector<256x256xbf16>, vector<1x256xf32> -> vector<1x256xf32>
    %c0_77 = arith.constant 0 : index
    %c0_78 = arith.constant 0 : index
    %122 = vector.load %arg9[%c0_77, %c0_78] : memref<1x256xf32, #tpu.memory_space<vmem>>, vector<1x256xf32>
    %123 = arith.addf %121, %122 : vector<1x256xf32>
    %cst_79 = arith.constant 0.000000e+00 : f32
    %124 = vector.broadcast %cst_79 : f32 to vector<1x256xf32>
    %125 = arith.maximumf %123, %124 : vector<1x256xf32>
    %c0_80 = arith.constant 0 : index
    %c0_81 = arith.constant 0 : index
    %126 = vector.load %arg10[%c0_80, %c0_81] : memref<1x256xf32, #tpu.memory_space<vmem>>, vector<1x256xf32>
    %127 = arith.mulf %126, %125 : vector<1x256xf32>
    %cst_82 = arith.constant dense<0.000000e+00> : vector<1xf32>
    %128 = vector.multi_reduction <add>, %127, %cst_82 [1] : vector<1x256xf32> to vector<1xf32>
    %129 = vector.shape_cast %128 : vector<1xf32> to vector<1x1xf32>
    %c0_83 = arith.constant 0 : index
    %c0_84 = arith.constant 0 : index
    %130 = vector.load %arg11[%c0_83, %c0_84] : memref<1x1xf32, #tpu.memory_space<vmem>>, vector<1x1xf32>
    %131 = arith.addf %129, %130 : vector<1x1xf32>
    %cst_85 = arith.constant 0.000000e+00 : f32
    %132 = vector.broadcast %cst_85 : f32 to vector<1x1xf32>
    %133 = arith.subf %132, %131 : vector<1x1xf32>
    %134 = math.exp %133 : vector<1x1xf32>
    %cst_86 = arith.constant 1.000000e+00 : f32
    %135 = vector.broadcast %cst_86 : f32 to vector<1x1xf32>
    %136 = arith.addf %135, %134 : vector<1x1xf32>
    %cst_87 = arith.constant 1.000000e+00 : f32
    %137 = vector.broadcast %cst_87 : f32 to vector<1x1xf32>
    %138 = arith.divf %137, %136 : vector<1x1xf32>
    %c0_88 = arith.constant 0 : index
    %c0_89 = arith.constant 0 : index
    %c0_90 = arith.constant 0 : index
    %139 = vector.load %arg12[%c0_88, %c0_89, %c0_90] : memref<1x1x1xf32, #tpu.memory_space<vmem>>, vector<1x1x1xf32>
    %140 = vector.shape_cast %139 : vector<1x1x1xf32> to vector<1x1xf32>
    %141 = vector.shape_cast %138 : vector<1x1xf32> to vector<1x1x1xf32>
    tpu.vector_store %arg12[%c0_88, %c0_89, %c0_90], %141 {strides = array<i32>} : memref<1x1x1xf32, #tpu.memory_space<vmem>>, vector<1x1x1xf32>,
    return
  }
  func.func @transform_0(%arg0: i32) -> (i32, i32, i32) {
    %c0_i32 = arith.constant 0 : i32
    %c0_i32_0 = arith.constant 0 : i32
    %c0_i32_1 = arith.constant 0 : i32
    return %arg0, %c0_i32, %c0_i32_0 : i32, i32, i32
  }
  func.func @transform_1(%arg0: i32) -> (i32, i32) {
    %c0_i32 = arith.constant 0 : i32
    %c0_i32_0 = arith.constant 0 : i32
    %c0_i32_1 = arith.constant 0 : i32
    return %c0_i32, %c0_i32_0 : i32, i32
  }
  func.func @transform_2(%arg0: i32) -> (i32, i32) {
    %c0_i32 = arith.constant 0 : i32
    %c0_i32_0 = arith.constant 0 : i32
    %c0_i32_1 = arith.constant 0 : i32
    return %c0_i32, %c0_i32_0 : i32, i32
  }
  func.func @transform_3(%arg0: i32) -> (i32, i32) {
    %c0_i32 = arith.constant 0 : i32
    %c0_i32_0 = arith.constant 0 : i32
    %c0_i32_1 = arith.constant 0 : i32
    return %c0_i32, %c0_i32_0 : i32, i32
  }
  func.func @transform_4(%arg0: i32) -> (i32, i32) {
    %c0_i32 = arith.constant 0 : i32
    %c0_i32_0 = arith.constant 0 : i32
    %c0_i32_1 = arith.constant 0 : i32
    return %c0_i32, %c0_i32_0 : i32, i32
  }
  func.func @transform_5(%arg0: i32) -> (i32, i32) {
    %c0_i32 = arith.constant 0 : i32
    %c0_i32_0 = arith.constant 0 : i32
    %c0_i32_1 = arith.constant 0 : i32
    return %c0_i32, %c0_i32_0 : i32, i32
  }
  func.func @transform_6(%arg0: i32) -> (i32, i32) {
    %c0_i32 = arith.constant 0 : i32
    %c0_i32_0 = arith.constant 0 : i32
    %c0_i32_1 = arith.constant 0 : i32
    return %c0_i32, %c0_i32_0 : i32, i32
  }
  func.func @transform_7(%arg0: i32) -> (i32, i32) {
    %c0_i32 = arith.constant 0 : i32
    %c0_i32_0 = arith.constant 0 : i32
    %c0_i32_1 = arith.constant 0 : i32
    return %c0_i32, %c0_i32_0 : i32, i32
  }
  func.func @transform_8(%arg0: i32) -> (i32, i32) {
    %c0_i32 = arith.constant 0 : i32
    %c0_i32_0 = arith.constant 0 : i32
    %c0_i32_1 = arith.constant 0 : i32
    return %c0_i32, %c0_i32_0 : i32, i32
  }
  func.func @transform_9(%arg0: i32) -> (i32, i32) {
    %c0_i32 = arith.constant 0 : i32
    %c0_i32_0 = arith.constant 0 : i32
    %c0_i32_1 = arith.constant 0 : i32
    return %c0_i32, %c0_i32_0 : i32, i32
  }
  func.func @transform_10(%arg0: i32) -> (i32, i32) {
    %c0_i32 = arith.constant 0 : i32
    %c0_i32_0 = arith.constant 0 : i32
    %c0_i32_1 = arith.constant 0 : i32
    return %c0_i32, %c0_i32_0 : i32, i32
  }
  func.func @transform_11(%arg0: i32) -> (i32, i32, i32) {
    %c0_i32 = arith.constant 0 : i32
    %c0_i32_0 = arith.constant 0 : i32
    %c0_i32_1 = arith.constant 0 : i32
    return %arg0, %c0_i32, %c0_i32_0 : i32, i32, i32
  }
}

</mosaic_0001>

<llo_original>
// kernel: forward.1
$region0: #{forward.1}
  #allocation0 [shape = 'u32[]', space=smem, size = 0x4, offset = 0x4, fixed_abs, tag = 'smem constant byte address 0x4 - core index']
  #allocation1 [shape = 'u32[144,128]{1,0:T(1,128)}', space=vmem, size = 0x12000, scoped, tag = 'internal scratch']
  #allocation2 [shape = 'f32[200,40]{1,0:T(8,128)}', space=vmem, size = 0x19000, scoped, tag = 'scratch operand']
  #allocation3 [shape = 'bf16[192,38]{1,0:T(8,128)(2,1)}', space=vmem, size = 0xc000, scoped, tag = 'scratch operand']
  #allocation4 [shape = 'f32[1,1]{1,0:T(1,128)S(1)}', space=vmem, size = 0x200, scoped, tag = 'scoped memory for forward.1']
  %s0 = inlined_call_operand.vmem [shape: f32[2,8,64], index: 0, kind: input, shape index: {}]
  %s1 = inlined_call_operand.hbm [shape: bf16[64,200], index: 1, kind: input, shape index: {}]
  %s2 = inlined_call_operand.vmem [shape: f32[64,1], index: 2, kind: input, shape index: {}]
  %s3 = inlined_call_operand.hbm [shape: bf16[64,192], index: 3, kind: input, shape index: {}]
  %s4 = inlined_call_operand.vmem [shape: f32[64,1], index: 4, kind: input, shape index: {}]
  %s5 = inlined_call_operand.vmem [shape: f32[64,256], index: 5, kind: input, shape index: {}]
  %s6 = inlined_call_operand.vmem [shape: f32[1,256], index: 6, kind: input, shape index: {}]
  %s7 = inlined_call_operand.hbm [shape: bf16[256,256], index: 7, kind: input, shape index: {}]
  %s8 = inlined_call_operand.vmem [shape: f32[1,256], index: 8, kind: input, shape index: {}]
  %s9 = inlined_call_operand.vmem [shape: f32[1,256], index: 9, kind: input, shape index: {}]
  %s10 = inlined_call_operand.<no memory space> [shape: f32[1,1], index: 10, kind: input, shape index: {}]
  %s11 = inlined_call_operand.vmem [shape: f32[2,1,1], index: 11, kind: output, shape index: {}]
  %s12 = sld [smem:[#allocation0]]
  $region89: #{forward.1} parent=0
    _
  %s14 = ssub.s32 1, %s12
  %s15 = scalar_select 0, %s14, %s12
  %v16 = vstv %s10
  %17 = vst [vmem:[#allocation4] sm:$0x1] %v16
  $region1: #{forward.1} parent=0
    #allocation5 [shape = 'u8[32768]{0}', space=vmem, size = 0x8000, scoped, tag = 'input window, operand 1, single buffered']
    #allocation6 [shape = 's32[2]{0}', space=sflag, size = 0x8, scoped, tag = 'scoped memory for forward.1']
    #allocation7 [shape = 'u8[32768]{0}', space=vmem, size = 0x8000, scoped, tag = 'input window, operand 3, single buffered']
    #allocation8 [shape = 's32[1]{0}', space=sflag, size = 0x4, scoped, tag = 'scoped memory for forward.1']
    #allocation9 [shape = 'u8[131072]{0}', space=vmem, size = 0x20000, scoped, tag = 'input window, operand 7, single buffered']
    %18 = vsyncpa [#allocation6], 0
    %19 = vsyncpa [#allocation8], 0
    loop: start=0, step=1, limit=4
    $region2: #{forward.1} parent=1 // loop_pre_header
      _
    $region3: #{forward.1} parent=1 // loop_header
      %s21 = sphi 0, %s25
      %p22 = scmp.ge.s32.totalorder %s21, 4
      %s31 = sphi 0, %s33
      %s34 = sphi 0, %s31
      %s35 = sphi 0, %s34
      %s51 = sphi 0, %s35
      %s55 = sphi 0, %s55
      %s57 = sphi 0, %s55
      %s58 = sphi 0, %s57
      %s72 = sphi 0, %s58
      %s76 = sphi 0, %s76
      %s78 = sphi 0, %s76
      %s79 = sphi 0, %s78
      %s93 = sphi 0, %s79
      %s97 = sphi 0, %s97
      %s99 = sphi 0, %s97
      %s100 = sphi 0, %s99
      %s114 = sphi 0, %s100
      %s118 = sphi 0, %s118
      %s120 = sphi 0, %s118
      %s121 = sphi 0, %s120
      %s135 = sphi 0, %s121
      %s139 = sphi 0, %s139
      %s141 = sphi 0, %s139
      %s142 = sphi 0, %s141
      %s156 = sphi 0, %s142
      %s160 = sphi 0, %s160
      %s162 = sphi 0, %s160
      %s163 = sphi 0, %s162
      %s177 = sphi 0, %s163
      %s181 = sphi 0, %s181
      %s183 = sphi 0, %s181
      %s184 = sphi 0, %s183
      %s198 = sphi 0, %s184
      %s202 = sphi 0, %s202
      %s204 = sphi 0, %s202
      %s205 = sphi 0, %s204
      %s219 = sphi 0, %s205
      %s223 = sphi 0, %s223
      %s225 = sphi 0, %s223
      %s226 = sphi 0, %s225
      %s240 = sphi 0, %s226
      %s244 = sphi 0, %s244
      %s246 = sphi 0, %s244
      %s247 = sphi 0, %s246
      %s261 = sphi 0, %s247
      %s267 = sphi 0, %s269
      %s270 = sphi 0, %s267
      %s271 = sphi 0, %s270
      %s287 = sphi 0, %s271
    $region4: #{forward.1} parent=1 // loop_header_branch
      %24 = sbr.rel (%p22) target = $region8
    $region5: #{forward.1} parent=1 // loop_body
      %s26 = ssub.s32 %s21, 1
      %s27 = ssub.s32 %s21, 2
      %s28 = sadd.s32 %s21, 1
      %s29 = ssub.s32 %s21, %s28
      %p30 = scmp.eq.s32.totalorder %s29, 0
      %s32 = sadd.s32 %s31, 1
      %s33 = scalar_select %p30, %s31, %s32
      %p36 = pneg %p30
      %p37 = scmp.eq.s32.totalorder %s21, 1
      %p38 = por %p36, %p37
      %p39 = scmp.ne.s32.totalorder %s31, %s34
      %p40 = scmp.eq.s32.totalorder %s21, 0
      %p41 = por %p39, %p40
      %p42 = scmp.ne.s32.totalorder %s31, %s34
      %p43 = scmp.eq.s32.totalorder %s26, 1
      %p44 = por %p42, %p43
      %p45 = scmp.ne.s32.totalorder %s34, %s35
      %p46 = scmp.eq.s32.totalorder %s26, 0
      %p47 = por %p45, %p46
      %p48 = scmp.ne.s32.totalorder %s34, %s35
      %p49 = scmp.eq.s32.totalorder %s27, 1
      %p50 = por %p48, %p49
      %p52 = scmp.ne.s32.totalorder %s35, %s51
      %p53 = scmp.eq.s32.totalorder %s27, 0
      %p54 = por %p52, %p53
      %s56 = sadd.s32 %s55, 1
      %p59 = scmp.eq.s32.totalorder %s21, 1
      %p60 = scmp.ne.s32.totalorder %s55, %s57
      %p61 = scmp.eq.s32.totalorder %s21, 0
      %p62 = por %p60, %p61
      %p63 = scmp.ne.s32.totalorder %s55, %s57
      %p64 = scmp.eq.s32.totalorder %s26, 1
      %p65 = por %p63, %p64
      %p66 = scmp.ne.s32.totalorder %s57, %s58
      %p67 = scmp.eq.s32.totalorder %s26, 0
      %p68 = por %p66, %p67
      %p69 = scmp.ne.s32.totalorder %s57, %s58
      %p70 = scmp.eq.s32.totalorder %s27, 1
      %p71 = por %p69, %p70
      %p73 = scmp.ne.s32.totalorder %s58, %s72
      %p74 = scmp.eq.s32.totalorder %s27, 0
      %p75 = por %p73, %p74
      %s77 = sadd.s32 %s76, 1
      %p80 = scmp.eq.s32.totalorder %s21, 1
      %p81 = scmp.ne.s32.totalorder %s76, %s78
      %p82 = scmp.eq.s32.totalorder %s21, 0
      %p83 = por %p81, %p82
      %p84 = scmp.ne.s32.totalorder %s76, %s78
      %p85 = scmp.eq.s32.totalorder %s26, 1
      %p86 = por %p84, %p85
      %p87 = scmp.ne.s32.totalorder %s78, %s79
      %p88 = scmp.eq.s32.totalorder %s26, 0
      %p89 = por %p87, %p88
      %p90 = scmp.ne.s32.totalorder %s78, %s79
      %p91 = scmp.eq.s32.totalorder %s27, 1
      %p92 = por %p90, %p91
      %p94 = scmp.ne.s32.totalorder %s79, %s93
      %p95 = scmp.eq.s32.totalorder %s27, 0
      %p96 = por %p94, %p95
      %s98 = sadd.s32 %s97, 1
      %p101 = scmp.eq.s32.totalorder %s21, 1
      %p102 = scmp.ne.s32.totalorder %s97, %s99
      %p103 = scmp.eq.s32.totalorder %s21, 0
      %p104 = por %p102, %p103
      %p105 = scmp.ne.s32.totalorder %s97, %s99
      %p106 = scmp.eq.s32.totalorder %s26, 1
      %p107 = por %p105, %p106
      %p108 = scmp.ne.s32.totalorder %s99, %s100
      %p109 = scmp.eq.s32.totalorder %s26, 0
      %p110 = por %p108, %p109
      %p111 = scmp.ne.s32.totalorder %s99, %s100
      %p112 = scmp.eq.s32.totalorder %s27, 1
      %p113 = por %p111, %p112
      %p115 = scmp.ne.s32.totalorder %s100, %s114
      %p116 = scmp.eq.s32.totalorder %s27, 0
      %p117 = por %p115, %p116
      %s119 = sadd.s32 %s118, 1
      %p122 = scmp.eq.s32.totalorder %s21, 1
      %p123 = scmp.ne.s32.totalorder %s118, %s120
      %p124 = scmp.eq.s32.totalorder %s21, 0
      %p125 = por %p123, %p124
      %p126 = scmp.ne.s32.totalorder %s118, %s120
      %p127 = scmp.eq.s32.totalorder %s26, 1
      %p128 = por %p126, %p127
      %p129 = scmp.ne.s32.totalorder %s120, %s121
      %p130 = scmp.eq.s32.totalorder %s26, 0
      %p131 = por %p129, %p130
      %p132 = scmp.ne.s32.totalorder %s120, %s121
      %p133 = scmp.eq.s32.totalorder %s27, 1
      %p134 = por %p132, %p133
      %p136 = scmp.ne.s32.totalorder %s121, %s135
      %p137 = scmp.eq.s32.totalorder %s27, 0
      %p138 = por %p136, %p137
      %s140 = sadd.s32 %s139, 1
      %p143 = scmp.eq.s32.totalorder %s21, 1
      %p144 = scmp.ne.s32.totalorder %s139, %s141
      %p145 = scmp.eq.s32.totalorder %s21, 0
      %p146 = por %p144, %p145
      %p147 = scmp.ne.s32.totalorder %s139, %s141
      %p148 = scmp.eq.s32.totalorder %s26, 1
      %p149 = por %p147, %p148
      %p150 = scmp.ne.s32.totalorder %s141, %s142
      %p151 = scmp.eq.s32.totalorder %s26, 0
      %p152 = por %p150, %p151
      %p153 = scmp.ne.s32.totalorder %s141, %s142
      %p154 = scmp.eq.s32.totalorder %s27, 1
      %p155 = por %p153, %p154
      %p157 = scmp.ne.s32.totalorder %s142, %s156
      %p158 = scmp.eq.s32.totalorder %s27, 0
      %p159 = por %p157, %p158
      %s161 = sadd.s32 %s160, 1
      %p164 = scmp.eq.s32.totalorder %s21, 1
      %p165 = scmp.ne.s32.totalorder %s160, %s162
      %p166 = scmp.eq.s32.totalorder %s21, 0
      %p167 = por %p165, %p166
      %p168 = scmp.ne.s32.totalorder %s160, %s162
      %p169 = scmp.eq.s32.totalorder %s26, 1
      %p170 = por %p168, %p169
      %p171 = scmp.ne.s32.totalorder %s162, %s163
      %p172 = scmp.eq.s32.totalorder %s26, 0
      %p173 = por %p171, %p172
      %p174 = scmp.ne.s32.totalorder %s162, %s163
      %p175 = scmp.eq.s32.totalorder %s27, 1
      %p176 = por %p174, %p175
      %p178 = scmp.ne.s32.totalorder %s163, %s177
      %p179 = scmp.eq.s32.totalorder %s27, 0
      %p180 = por %p178, %p179
      %s182 = sadd.s32 %s181, 1
      %p185 = scmp.eq.s32.totalorder %s21, 1
      %p186 = scmp.ne.s32.totalorder %s181, %s183
      %p187 = scmp.eq.s32.totalorder %s21, 0
      %p188 = por %p186, %p187
      %p189 = scmp.ne.s32.totalorder %s181, %s183
      %p190 = scmp.eq.s32.totalorder %s26, 1
      %p191 = por %p189, %p190
      %p192 = scmp.ne.s32.totalorder %s183, %s184
      %p193 = scmp.eq.s32.totalorder %s26, 0
      %p194 = por %p192, %p193
      %p195 = scmp.ne.s32.totalorder %s183, %s184
      %p196 = scmp.eq.s32.totalorder %s27, 1
      %p197 = por %p195, %p196
      %p199 = scmp.ne.s32.totalorder %s184, %s198
      %p200 = scmp.eq.s32.totalorder %s27, 0
      %p201 = por %p199, %p200
      %s203 = sadd.s32 %s202, 1
      %p206 = scmp.eq.s32.totalorder %s21, 1
      %p207 = scmp.ne.s32.totalorder %s202, %s204
      %p208 = scmp.eq.s32.totalorder %s21, 0
      %p209 = por %p207, %p208
      %p210 = scmp.ne.s32.totalorder %s202, %s204
      %p211 = scmp.eq.s32.totalorder %s26, 1
      %p212 = por %p210, %p211
      %p213 = scmp.ne.s32.totalorder %s204, %s205
      %p214 = scmp.eq.s32.totalorder %s26, 0
      %p215 = por %p213, %p214
      %p216 = scmp.ne.s32.totalorder %s204, %s205
      %p217 = scmp.eq.s32.totalorder %s27, 1
      %p218 = por %p216, %p217
      %p220 = scmp.ne.s32.totalorder %s205, %s219
      %p221 = scmp.eq.s32.totalorder %s27, 0
      %p222 = por %p220, %p221
      %s224 = sadd.s32 %s223, 1
      %p227 = scmp.eq.s32.totalorder %s21, 1
      %p228 = scmp.ne.s32.totalorder %s223, %s225
      %p229 = scmp.eq.s32.totalorder %s21, 0
      %p230 = por %p228, %p229
      %p231 = scmp.ne.s32.totalorder %s223, %s225
      %p232 = scmp.eq.s32.totalorder %s26, 1
      %p233 = por %p231, %p232
      %p234 = scmp.ne.s32.totalorder %s225, %s226
      %p235 = scmp.eq.s32.totalorder %s26, 0
      %p236 = por %p234, %p235
      %p237 = scmp.ne.s32.totalorder %s225, %s226
      %p238 = scmp.eq.s32.totalorder %s27, 1
      %p239 = por %p237, %p238
      %p241 = scmp.ne.s32.totalorder %s226, %s240
      %p242 = scmp.eq.s32.totalorder %s27, 0
      %p243 = por %p241, %p242
      %s245 = sadd.s32 %s244, 1
      %p248 = scmp.eq.s32.totalorder %s21, 1
      %p249 = scmp.ne.s32.totalorder %s244, %s246
      %p250 = scmp.eq.s32.totalorder %s21, 0
      %p251 = por %p249, %p250
      %p252 = scmp.ne.s32.totalorder %s244, %s246
      %p253 = scmp.eq.s32.totalorder %s26, 1
      %p254 = por %p252, %p253
      %p255 = scmp.ne.s32.totalorder %s246, %s247
      %p256 = scmp.eq.s32.totalorder %s26, 0
      %p257 = por %p255, %p256
      %p258 = scmp.ne.s32.totalorder %s246, %s247
      %p259 = scmp.eq.s32.totalorder %s27, 1
      %p260 = por %p258, %p259
      %p262 = scmp.ne.s32.totalorder %s247, %s261
      %p263 = scmp.eq.s32.totalorder %s27, 0
      %p264 = por %p262, %p263
      %s265 = ssub.s32 %s21, %s28
      %p266 = scmp.eq.s32.totalorder %s265, 0
      %s268 = sadd.s32 %s267, 1
      %s269 = scalar_select %p266, %s267, %s268
      %p272 = pneg %p266
      %p273 = scmp.eq.s32.totalorder %s21, 1
      %p274 = por %p272, %p273
      %p275 = scmp.ne.s32.totalorder %s267, %s270
      %p276 = scmp.eq.s32.totalorder %s21, 0
      %p277 = por %p275, %p276
      %p278 = scmp.ne.s32.totalorder %s267, %s270
      %p279 = scmp.eq.s32.totalorder %s26, 1
      %p280 = por %p278, %p279
      %p281 = scmp.ne.s32.totalorder %s270, %s271
      %p282 = scmp.eq.s32.totalorder %s26, 0
      %p283 = por %p281, %p282
      %p284 = scmp.ne.s32.totalorder %s270, %s271
      %p285 = scmp.eq.s32.totalorder %s27, 1
      %p286 = por %p284, %p285
      %p288 = scmp.ne.s32.totalorder %s271, %s287
      %p289 = scmp.eq.s32.totalorder %s27, 0
      %p290 = por %p288, %p289
      %p291 = scmp.le.s32.totalorder 1, %s21
      %p292 = scmp.lt.s32.totalorder %s21, 3
      %p293 = pnand %p291, %p292
      %p294 = pneg %p293
      // Predicated region
      $region9: #{forward.1} parent=5 // pred_check
        _
      $region10: #{forward.1} parent=5 // pred_check_branch
        %296 = sbr.rel (%p293) target = $region12
      $region11: #{forward.1} parent=5 // pred_region
        %s297 = ssub.s32 %s21, 1
        // Predicated region
        $region13: #{forward.1} parent=11 // pred_check
          %p298 = pneg %p68
        $region14: #{forward.1} parent=11 // pred_check_branch
          %300 = sbr.rel (%p298) target = $region16
        $region15: #{forward.1} parent=11 // pred_region
          %s302 = ssub.s32 1024, 1024
          %303 = vsyncadd [#allocation6], %s302
          %s304 = sshll.u32 [#allocation5], 4
          %s305 = int_to_ptr.vmem [resolvable:$true] %s304
          %310 = dma.hbm_to_vmem [thread:$0]  %s1, 1024, %s305, [#allocation6], 128, 128, 8
        $region16: #{forward.1} parent=11 // pred_fallthru
          _
        // Predicated region
        $region17: #{forward.1} parent=11 // pred_check
          %p311 = pneg %p89
        $region18: #{forward.1} parent=11 // pred_check_branch
          %313 = sbr.rel (%p311) target = $region20
        $region19: #{forward.1} parent=11 // pred_region
          _
        $region20: #{forward.1} parent=11 // pred_fallthru
          _
        // Predicated region
        $region21: #{forward.1} parent=11 // pred_check
          %p314 = pneg %p110
        $region22: #{forward.1} parent=11 // pred_check_branch
          %316 = sbr.rel (%p314) target = $region24
        $region23: #{forward.1} parent=11 // pred_region
          %s318 = ssub.s32 1024, 1024
          %319 = vsyncadd [#allocation8], %s318
          %s320 = sshll.u32 [#allocation7], 4
          %s321 = int_to_ptr.vmem [resolvable:$true] %s320
          %326 = dma.hbm_to_vmem [thread:$0]  %s3, 1024, %s321, [#allocation8], 128, 128, 8
        $region24: #{forward.1} parent=11 // pred_fallthru
          _
        // Predicated region
        $region25: #{forward.1} parent=11 // pred_check
          %p327 = pneg %p131
        $region26: #{forward.1} parent=11 // pred_check_branch
          %329 = sbr.rel (%p327) target = $region28
        $region27: #{forward.1} parent=11 // pred_region
          _
        $region28: #{forward.1} parent=11 // pred_fallthru
          _
        // Predicated region
        $region29: #{forward.1} parent=11 // pred_check
          %p330 = pneg %p152
        $region30: #{forward.1} parent=11 // pred_check_branch
          %332 = sbr.rel (%p330) target = $region32
        $region31: #{forward.1} parent=11 // pred_region
          _
        $region32: #{forward.1} parent=11 // pred_fallthru
          _
        // Predicated region
        $region33: #{forward.1} parent=11 // pred_check
          %p333 = pneg %p173
        $region34: #{forward.1} parent=11 // pred_check_branch
          %335 = sbr.rel (%p333) target = $region36
        $region35: #{forward.1} parent=11 // pred_region
          _
        $region36: #{forward.1} parent=11 // pred_fallthru
          _
        // Predicated region
        $region37: #{forward.1} parent=11 // pred_check
          %p336 = pneg %p194
        $region38: #{forward.1} parent=11 // pred_check_branch
          %338 = sbr.rel (%p336) target = $region40
        $region39: #{forward.1} parent=11 // pred_region
          %s340 = ssub.s32 4096, 4096
          %341 = vsyncadd [#allocation8], %s340
          %s342 = sshll.u32 [#allocation9], 4
          %s343 = int_to_ptr.vmem [resolvable:$true] %s342
          %348 = dma.hbm_to_vmem [thread:$0]  %s7, 4096, %s343, [#allocation8], 128, 128, 8
        $region40: #{forward.1} parent=11 // pred_fallthru
          _
        // Predicated region
        $region41: #{forward.1} parent=11 // pred_check
          %p349 = pneg %p215
        $region42: #{forward.1} parent=11 // pred_check_branch
          %351 = sbr.rel (%p349) target = $region44
        $region43: #{forward.1} parent=11 // pred_region
          _
        $region44: #{forward.1} parent=11 // pred_fallthru
          _
        // Predicated region
        $region45: #{forward.1} parent=11 // pred_check
          %p352 = pneg %p236
        $region46: #{forward.1} parent=11 // pred_check_branch
          %354 = sbr.rel (%p352) target = $region48
        $region47: #{forward.1} parent=11 // pred_region
          _
        $region48: #{forward.1} parent=11 // pred_fallthru
          _
        // Predicated region
        $region49: #{forward.1} parent=11 // pred_check
          %p355 = pneg %p257
        $region50: #{forward.1} parent=11 // pred_check_branch
          %357 = sbr.rel (%p355) target = $region52
        $region51: #{forward.1} parent=11 // pred_region
          _
        $region52: #{forward.1} parent=11 // pred_fallthru
          _
      $region12: #{forward.1} parent=5 // pred_fallthru
        _
      %p358 = scmp.lt.s32.totalorder %s21, 2
      // Predicated region
      $region53: #{forward.1} parent=5 // pred_check
        %p359 = pneg %p358
      $region54: #{forward.1} parent=5 // pred_check_branch
        %361 = sbr.rel (%p359) target = $region56
      $region55: #{forward.1} parent=5 // pred_region
        // Predicated region
        $region57: #{forward.1} parent=55 // pred_check
          %p362 = pneg %p41
        $region58: #{forward.1} parent=55 // pred_check_branch
          %364 = sbr.rel (%p362) target = $region60
        $region59: #{forward.1} parent=55 // pred_region
          %p365 = scmp.lt.s32.totalorder %s21, 1
          %s366 = scalar_select %p365, %s21, 1
          %s367 = smul.addr %s366, 8
          %s368 = scalar_lea.vmem %s0, %s367
        $region60: #{forward.1} parent=55 // pred_fallthru
          _
      $region56: #{forward.1} parent=5 // pred_fallthru
        _
      %p369 = scmp.le.s32.totalorder 1, %s21
      %p370 = scmp.lt.s32.totalorder %s21, 3
      %p371 = pnand %p369, %p370
      %p372 = pneg %p371
      // Predicated region
      $region61: #{forward.1} parent=5 // pred_check
        _
      $region62: #{forward.1} parent=5 // pred_check_branch
        %374 = sbr.rel (%p371) target = $region64
      $region63: #{forward.1} parent=5 // pred_region
        %s375 = ssub.s32 %s21, 1
        // Predicated region
        $region65: #{forward.1} parent=63 // pred_check
          %p376 = pneg %p68
        $region66: #{forward.1} parent=63 // pred_check_branch
          %378 = sbr.rel (%p376) target = $region68
        $region67: #{forward.1} parent=63 // pred_region
          %379 = dma.done [#allocation6], 1024
        $region68: #{forward.1} parent=63 // pred_fallthru
          _
        // Predicated region
        $region69: #{forward.1} parent=63 // pred_check
          %p380 = pneg %p110
        $region70: #{forward.1} parent=63 // pred_check_branch
          %382 = sbr.rel (%p380) target = $region72
        $region71: #{forward.1} parent=63 // pred_region
          %383 = dma.done [#allocation8], 1024
        $region72: #{forward.1} parent=63 // pred_fallthru
          _
        // Predicated region
        $region73: #{forward.1} parent=63 // pred_check
          %p384 = pneg %p194
        $region74: #{forward.1} parent=63 // pred_check_branch
          %386 = sbr.rel (%p384) target = $region76
        $region75: #{forward.1} parent=63 // pred_region
          %387 = dma.done [#allocation8], 4096
        $region76: #{forward.1} parent=63 // pred_fallthru
          _
        %p388 = scmp.lt.s32.totalorder %s26, 1
        %s389 = scalar_select %p388, %s26, 1
        %s390 = smul.addr %s389, 8
        %s391 = scalar_lea.vmem %s0, %s390
        %p392 = pneg %p47
        %p393 = pneg %p44
        %p394 = pneg %p68
        %p395 = pneg %p65
        %p396 = pneg %p89
        %p397 = pneg %p86
        %p398 = pneg %p110
        %p399 = pneg %p107
        %p400 = pneg %p131
        %p401 = pneg %p128
        %p402 = pneg %p152
        %p403 = pneg %p149
        %p404 = pneg %p173
        %p405 = pneg %p170
        %p406 = pneg %p194
        %p407 = pneg %p191
        %p408 = pneg %p215
        %p409 = pneg %p212
        %p410 = pneg %p236
        %p411 = pneg %p233
        %p412 = pneg %p257
        %p413 = pneg %p254
        %p414 = pneg %p283
        %p415 = pneg %p280
        %p416 = scmp.lt.s32.totalorder %s26, 1
        %s417 = scalar_select %p416, %s26, 1
        %s418 = scalar_lea.vmem %s11, %s417
        %p419 = scmp.lt.s32.totalorder %s26, 1
        %s420 = scalar_select %p419, %s26, 1
        %s421 = smul.addr %s420, 8
        %s422 = scalar_lea.vmem %s0, %s421
        %p423 = scmp.lt.s32.totalorder %s26, 1
        %s424 = scalar_select %p423, %s26, 1
        %s425 = scalar_lea.vmem %s11, %s424
        %v427 = vld [vmem:[%s422] sm:$0xff]
        %vm428 = vcmask 326656
        %429 = vst.msk [vmem:[#allocation2] sm:$0xff] %vm428, %v427
        %431 = vrot.lane.b32.xlu0 %v427, 127
        %v432 = vpop.permute.xlu0 %431
        %434 = vst.msk [vmem:[#allocation2 + $0x8] sm:$0xff] %vm428, %v432
        %435 = vrot.lane.b32.xlu0 %v427, 126
        %v436 = vpop.permute.xlu0 %435
        %438 = vst.msk [vmem:[#allocation2 + $0x10] sm:$0xff] %vm428, %v436
        %439 = vrot.lane.b32.xlu0 %v427, 125
        %v440 = vpop.permute.xlu0 %439
        %442 = vst.msk [vmem:[#allocation2 + $0x18] sm:$0xff] %vm428, %v440
        %443 = vrot.lane.b32.xlu0 %v427, 124
        %v444 = vpop.permute.xlu0 %443
        %446 = vst.msk [vmem:[#allocation2 + $0x20] sm:$0xff] %vm428, %v444
        %447 = vrot.lane.b32.xlu0 %v427, 123
        %v448 = vpop.permute.xlu0 %447
        %450 = vst.msk [vmem:[#allocation2 + $0x28] sm:$0xff] %vm428, %v448
        %451 = vrot.lane.b32.xlu0 %v427, 122
        %v452 = vpop.permute.xlu0 %451
        %454 = vst.msk [vmem:[#allocation2 + $0x30] sm:$0xff] %vm428, %v452
        %455 = vrot.lane.b32.xlu0 %v427, 121
        %v456 = vpop.permute.xlu0 %455
        %458 = vst.msk [vmem:[#allocation2 + $0x38] sm:$0xff] %vm428, %v456
        %459 = vrot.lane.b32.xlu0 %v427, 120
        %v460 = vpop.permute.xlu0 %459
        %462 = vst.msk [vmem:[#allocation2 + $0x40] sm:$0xff] %vm428, %v460
        %463 = vrot.lane.b32.xlu0 %v427, 119
        %v464 = vpop.permute.xlu0 %463
        %466 = vst.msk [vmem:[#allocation2 + $0x48] sm:$0xff] %vm428, %v464
        %467 = vrot.lane.b32.xlu0 %v427, 118
        %v468 = vpop.permute.xlu0 %467
        %470 = vst.msk [vmem:[#allocation2 + $0x50] sm:$0xff] %vm428, %v468
        %471 = vrot.lane.b32.xlu0 %v427, 117
        %v472 = vpop.permute.xlu0 %471
        %474 = vst.msk [vmem:[#allocation2 + $0x58] sm:$0xff] %vm428, %v472
        %475 = vrot.lane.b32.xlu0 %v427, 116
        %v476 = vpop.permute.xlu0 %475
        %478 = vst.msk [vmem:[#allocation2 + $0x60] sm:$0xff] %vm428, %v476
        %479 = vrot.lane.b32.xlu0 %v427, 115
        %v480 = vpop.permute.xlu0 %479
        %482 = vst.msk [vmem:[#allocation2 + $0x68] sm:$0xff] %vm428, %v480
        %483 = vrot.lane.b32.xlu0 %v427, 114
        %v484 = vpop.permute.xlu0 %483
        %486 = vst.msk [vmem:[#allocation2 + $0x70] sm:$0xff] %vm428, %v484
        %487 = vrot.lane.b32.xlu0 %v427, 113
        %v488 = vpop.permute.xlu0 %487
        %490 = vst.msk [vmem:[#allocation2 + $0x78] sm:$0xff] %vm428, %v488
        %491 = vrot.lane.b32.xlu0 %v427, 112
        %v492 = vpop.permute.xlu0 %491
        %494 = vst.msk [vmem:[#allocation2 + $0x80] sm:$0xff] %vm428, %v492
        %495 = vrot.lane.b32.xlu0 %v427, 111
        %v496 = vpop.permute.xlu0 %495
        %498 = vst.msk [vmem:[#allocation2 + $0x88] sm:$0xff] %vm428, %v496
        %499 = vrot.lane.b32.xlu0 %v427, 110
        %v500 = vpop.permute.xlu0 %499
        %502 = vst.msk [vmem:[#allocation2 + $0x90] sm:$0xff] %vm428, %v500
        %503 = vrot.lane.b32.xlu0 %v427, 109
        %v504 = vpop.permute.xlu0 %503
        %506 = vst.msk [vmem:[#allocation2 + $0x98] sm:$0xff] %vm428, %v504
        %507 = vrot.lane.b32.xlu0 %v427, 108
        %v508 = vpop.permute.xlu0 %507
        %510 = vst.msk [vmem:[#allocation2 + $0xa0] sm:$0xff] %vm428, %v508
        %511 = vrot.lane.b32.xlu0 %v427, 107
        %v512 = vpop.permute.xlu0 %511
        %514 = vst.msk [vmem:[#allocation2 + $0xa8] sm:$0xff] %vm428, %v512
        %515 = vrot.lane.b32.xlu0 %v427, 106
        %v516 = vpop.permute.xlu0 %515
        %518 = vst.msk [vmem:[#allocation2 + $0xb0] sm:$0xff] %vm428, %v516
        %519 = vrot.lane.b32.xlu0 %v427, 105
        %v520 = vpop.permute.xlu0 %519
        %522 = vst.msk [vmem:[#allocation2 + $0xb8] sm:$0xff] %vm428, %v520
        %523 = vrot.lane.b32.xlu0 %v427, 104
        %v524 = vpop.permute.xlu0 %523
        %526 = vst.msk [vmem:[#allocation2 + $0xc0] sm:$0xff] %vm428, %v524
        %v527 = vld [vmem:[#allocation5] sm:$0xff]
        %v528 = vld [vmem:[#allocation5 + $0x8] sm:$0xff]
        %v529 = vld [vmem:[#allocation5 + $0x10] sm:$0xff]
        %v530 = vld [vmem:[#allocation5 + $0x18] sm:$0xff]
        %v531 = vld [vmem:[#allocation5 + $0x20] sm:$0xff]
        %v532 = vld [vmem:[#allocation5 + $0x28] sm:$0xff]
        %v533 = vld [vmem:[#allocation5 + $0x30] sm:$0xff]
        %v534 = vld [vmem:[#allocation5 + $0x38] sm:$0xff]
        %v535 = vld [vmem:[#allocation2] sm:$0xff]
        %v536 = vld [vmem:[#allocation2 + $0x8] sm:$0xff]
        %v537 = vld [vmem:[#allocation2 + $0x10] sm:$0xff]
        %v538 = vld [vmem:[#allocation2 + $0x18] sm:$0xff]
        %v539 = vld [vmem:[#allocation2 + $0x20] sm:$0xff]
        %v540 = vld [vmem:[#allocation2 + $0x28] sm:$0xff]
        %v541 = vld [vmem:[#allocation2 + $0x30] sm:$0xff]
        %v542 = vld [vmem:[#allocation2 + $0x38] sm:$0xff]
        %v543 = vld [vmem:[#allocation2 + $0x40] sm:$0xff]
        %v544 = vld [vmem:[#allocation2 + $0x48] sm:$0xff]
        %v545 = vld [vmem:[#allocation2 + $0x50] sm:$0xff]
        %v546 = vld [vmem:[#allocation2 + $0x58] sm:$0xff]
        %v547 = vld [vmem:[#allocation2 + $0x60] sm:$0xff]
        %v548 = vld [vmem:[#allocation2 + $0x68] sm:$0xff]
        %v549 = vld [vmem:[#allocation2 + $0x70] sm:$0xff]
        %v550 = vld [vmem:[#allocation2 + $0x78] sm:$0xff]
        %v551 = vld [vmem:[#allocation2 + $0x80] sm:$0xff]
        %v552 = vld [vmem:[#allocation2 + $0x88] sm:$0xff]
        %v553 = vld [vmem:[#allocation2 + $0x90] sm:$0xff]
        %v554 = vld [vmem:[#allocation2 + $0x98] sm:$0xff]
        %v555 = vld [vmem:[#allocation2 + $0xa0] sm:$0xff]
        %v556 = vld [vmem:[#allocation2 + $0xa8] sm:$0xff]
        %v557 = vld [vmem:[#allocation2 + $0xb0] sm:$0xff]
        %v558 = vld [vmem:[#allocation2 + $0xb8] sm:$0xff]
        %v559 = vld [vmem:[#allocation2 + $0xc0] sm:$0xff]
        %v560 = vpack.c.bf16 %v536, %v535
        %v561 = vpack.c.bf16 %v538, %v537
        %v562 = vpack.c.bf16 %v540, %v539
        %v563 = vpack.c.bf16 %v542, %v541
        %v564 = vpack.c.bf16 %v544, %v543
        %v565 = vpack.c.bf16 %v546, %v545
        %v566 = vpack.c.bf16 %v548, %v547
        %v567 = vpack.c.bf16 %v550, %v549
        %v568 = vpack.c.bf16 %v552, %v551
        %v569 = vpack.c.bf16 %v554, %v553
        %v570 = vpack.c.bf16 %v556, %v555
        %v571 = vpack.c.bf16 %v558, %v557
        %v572 = vpack.c.bf16 %v559, %v559
        %v573 = vld [vmem:[%s2] sm:$0xff]
        %v574 = vld [vmem:[%s2 + $0x8] sm:$0xff]
        %v575 = vld [vmem:[%s2 + $0x10] sm:$0xff]
        %v576 = vld [vmem:[%s2 + $0x18] sm:$0xff]
        %v577 = vld [vmem:[%s2 + $0x20] sm:$0xff]
        %v578 = vld [vmem:[%s2 + $0x28] sm:$0xff]
        %v579 = vld [vmem:[%s2 + $0x30] sm:$0xff]
        %v580 = vld [vmem:[%s2 + $0x38] sm:$0xff]
        %582 = vset.pattern.permute.xlu0 0
        %583 = vperm.xlu0 %582, %v573
        %v584 = vpop.permute.xlu0 %583
        %587 = vset.pattern.permute.xlu0 0
        %588 = vperm.xlu0 %587, %v574
        %v589 = vpop.permute.xlu0 %588
        %592 = vset.pattern.permute.xlu0 0
        %593 = vperm.xlu0 %592, %v575
        %v594 = vpop.permute.xlu0 %593
        %597 = vset.pattern.permute.xlu0 0
        %598 = vperm.xlu0 %597, %v576
        %v599 = vpop.permute.xlu0 %598
        %602 = vset.pattern.permute.xlu0 0
        %603 = vperm.xlu0 %602, %v577
        %v604 = vpop.permute.xlu0 %603
        %607 = vset.pattern.permute.xlu0 0
        %608 = vperm.xlu0 %607, %v578
        %v609 = vpop.permute.xlu0 %608
        %612 = vset.pattern.permute.xlu0 0
        %613 = vperm.xlu0 %612, %v579
        %v614 = vpop.permute.xlu0 %613
        %617 = vset.pattern.permute.xlu0 0
        %618 = vperm.xlu0 %617, %v580
        %v619 = vpop.permute.xlu0 %618
        %v629 = vunpack.c.l.b16 %v527
        %v630 = vunpack.c.h.b16 %v527
        %v631 = vunpack.c.l.b16 %v528
        %v632 = vunpack.c.h.b16 %v528
        %v633 = vunpack.c.l.b16 %v529
        %v634 = vunpack.c.h.b16 %v529
        %v635 = vunpack.c.l.b16 %v530
        %v636 = vunpack.c.h.b16 %v530
        %v637 = vunpack.c.l.b16 %v531
        %v638 = vunpack.c.h.b16 %v531
        %v639 = vunpack.c.l.b16 %v532
        %v640 = vunpack.c.h.b16 %v532
        %v641 = vunpack.c.l.b16 %v533
        %v642 = vunpack.c.h.b16 %v533
        %v643 = vunpack.c.l.b16 %v534
        %v644 = vunpack.c.h.b16 %v534
        %v645 = vpack.c.b16 %v631, %v629
        %v646 = vpack.c.b16 %v632, %v630
        %v647 = vpack.c.b16 %v635, %v633
        %v648 = vpack.c.b16 %v636, %v634
        %v649 = vpack.c.b16 %v639, %v637
        %v650 = vpack.c.b16 %v640, %v638
        %v651 = vpack.c.b16 %v643, %v641
        %v652 = vpack.c.b16 %v644, %v642
        %vm657 = vcmask 588800
        %v659 = vsel %vm657, %v646, 0
        %v662 = vsel %vm657, %v648, 0
        %v665 = vsel %vm657, %v650, 0
        %v668 = vsel %vm657, %v652, 0
        %vm670 = vcmask 1043456
        %v672 = vsel %vm670, %v572, 0
        %674 = vmatprep.subr.bf16.mxu0 0
        %675 = vmatpush1.bf16.msra.mxu0 %v567
        %676 = vmatprep.subr.bf16.mxu0 0
        %677 = vmatpush1.bf16.msra.mxu0 %v566
        %678 = vmatprep.subr.bf16.mxu0 0
        %679 = vmatpush1.bf16.msra.mxu0 %v565
        %680 = vmatprep.subr.bf16.mxu0 0
        %681 = vmatpush1.bf16.msra.mxu0 %v564
        %682 = vmatprep.subr.bf16.mxu0 0
        %683 = vmatpush1.bf16.msra.mxu0 %v563
        %684 = vmatprep.subr.bf16.mxu0 0
        %685 = vmatpush1.bf16.msra.mxu0 %v562
        %686 = vmatprep.subr.bf16.mxu0 0
        %687 = vmatpush1.bf16.msra.mxu0 %v561
        %688 = vmatprep.subr.bf16.mxu0 0
        %689 = vmatpush1.bf16.msra.mxu0 %v560
        %690 = vmatprep.subr.bf16.mxu0 0
        %691 = vmatpush2.bf16.msra.mxu0 0
        %692 = vmatprep.subr.bf16.mxu0 0
        %693 = vmatpush2.bf16.msra.mxu0 0
        %694 = vmatprep.subr.bf16.mxu0 0
        %695 = vmatpush2.bf16.msra.mxu0 0
        %696 = vmatprep.subr.bf16.mxu0 0
        %697 = vmatpush2.bf16.msra.mxu0 %v672
        %698 = vmatprep.subr.bf16.mxu0 0
        %699 = vmatpush2.bf16.msra.mxu0 %v571
        %700 = vmatprep.subr.bf16.mxu0 0
        %701 = vmatpush2.bf16.msra.mxu0 %v570
        %702 = vmatprep.subr.bf16.mxu0 0
        %703 = vmatpush2.bf16.msra.mxu0 %v569
        %704 = vmatprep.subr.bf16.mxu0 0
        %705 = vmatpush2.bf16.msra.mxu0 %v568
        %706 = vmatprep.mubr.bf16.mxu0 %v659
        %707 = vmatmul.mubr.bf16.gmra.mxu0 %v645
        %v708 = vpop.f32.mrf.mxu0
        %v709 = vadd.f32 %v584, %v708
        %v710 = vpop.f32.mrf.mxu0
        %v711 = vpop.f32.mrf.mxu0
        %v712 = vadd.f32 %v589, %v711
        %v713 = vpop.f32.mrf.mxu0
        %714 = vmatprep.mubr.bf16.mxu0 %v662
        %715 = vmatmul.mubr.bf16.gmra.mxu0 %v647
        %v716 = vpop.f32.mrf.mxu0
        %v717 = vadd.f32 %v594, %v716
        %v718 = vpop.f32.mrf.mxu0
        %v719 = vpop.f32.mrf.mxu0
        %v720 = vadd.f32 %v599, %v719
        %v721 = vpop.f32.mrf.mxu0
        %722 = vmatprep.mubr.bf16.mxu0 %v665
        %723 = vmatmul.mubr.bf16.gmra.mxu0 %v649
        %v724 = vpop.f32.mrf.mxu0
        %v725 = vadd.f32 %v604, %v724
        %v726 = vpop.f32.mrf.mxu0
        %v727 = vpop.f32.mrf.mxu0
        %v728 = vadd.f32 %v609, %v727
        %v729 = vpop.f32.mrf.mxu0
        %730 = vmatprep.mubr.bf16.mxu0 %v668
        %731 = vmatmul.mubr.bf16.gmra.mxu0 %v651
        %v732 = vpop.f32.mrf.mxu0
        %v733 = vadd.f32 %v614, %v732
        %v734 = vpop.f32.mrf.mxu0
        %v735 = vpop.f32.mrf.mxu0
        %v736 = vadd.f32 %v619, %v735
        %v737 = vpop.f32.mrf.mxu0
        %738 = vdwg.mxu0
        %v739 = vmax.f32 %v709, 0.0
        %v740 = vmax.f32 %v712, 0.0
        %v741 = vmax.f32 %v717, 0.0
        %v742 = vmax.f32 %v720, 0.0
        %v743 = vmax.f32 %v725, 0.0
        %v744 = vmax.f32 %v728, 0.0
        %v745 = vmax.f32 %v733, 0.0
        %v746 = vmax.f32 %v736, 0.0
        %755 = vrot.lane.b32.xlu0 %v739, 127
        %v756 = vpop.permute.xlu0 %755
        %757 = vrot.lane.b32.xlu0 %v740, 127
        %v758 = vpop.permute.xlu0 %757
        %759 = vrot.lane.b32.xlu0 %v741, 127
        %v760 = vpop.permute.xlu0 %759
        %761 = vrot.lane.b32.xlu0 %v742, 127
        %v762 = vpop.permute.xlu0 %761
        %763 = vrot.lane.b32.xlu0 %v743, 127
        %v764 = vpop.permute.xlu0 %763
        %765 = vrot.lane.b32.xlu0 %v744, 127
        %v766 = vpop.permute.xlu0 %765
        %767 = vrot.lane.b32.xlu0 %v745, 127
        %v768 = vpop.permute.xlu0 %767
        %769 = vrot.lane.b32.xlu0 %v746, 127
        %v770 = vpop.permute.xlu0 %769
        %v779 = vmax.f32 %v739, %v756
        %v780 = vmax.f32 %v740, %v758
        %v781 = vmax.f32 %v741, %v760
        %v782 = vmax.f32 %v742, %v762
        %v783 = vmax.f32 %v743, %v764
        %v784 = vmax.f32 %v744, %v766
        %v785 = vmax.f32 %v745, %v768
        %v786 = vmax.f32 %v746, %v770
        %787 = vrot.lane.b32.xlu0 %v739, 126
        %v788 = vpop.permute.xlu0 %787
        %789 = vrot.lane.b32.xlu0 %v740, 126
        %v790 = vpop.permute.xlu0 %789
        %791 = vrot.lane.b32.xlu0 %v741, 126
        %v792 = vpop.permute.xlu0 %791
        %793 = vrot.lane.b32.xlu0 %v742, 126
        %v794 = vpop.permute.xlu0 %793
        %795 = vrot.lane.b32.xlu0 %v743, 126
        %v796 = vpop.permute.xlu0 %795
        %797 = vrot.lane.b32.xlu0 %v744, 126
        %v798 = vpop.permute.xlu0 %797
        %799 = vrot.lane.b32.xlu0 %v745, 126
        %v800 = vpop.permute.xlu0 %799
        %801 = vrot.lane.b32.xlu0 %v746, 126
        %v802 = vpop.permute.xlu0 %801
        %v811 = vmax.f32 %v779, %v788
        %v812 = vmax.f32 %v780, %v790
        %v813 = vmax.f32 %v781, %v792
        %v814 = vmax.f32 %v782, %v794
        %v815 = vmax.f32 %v783, %v796
        %v816 = vmax.f32 %v784, %v798
        %v817 = vmax.f32 %v785, %v800
        %v818 = vmax.f32 %v786, %v802
        %v819 = vld [vmem:[#allocation7] sm:$0xff]
        %v820 = vld [vmem:[#allocation7 + $0x8] sm:$0xff]
        %v821 = vld [vmem:[#allocation7 + $0x10] sm:$0xff]
        %v822 = vld [vmem:[#allocation7 + $0x18] sm:$0xff]
        %v823 = vld [vmem:[#allocation7 + $0x20] sm:$0xff]
        %v824 = vld [vmem:[#allocation7 + $0x28] sm:$0xff]
        %v825 = vld [vmem:[#allocation7 + $0x30] sm:$0xff]
        %v826 = vld [vmem:[#allocation7 + $0x38] sm:$0xff]
        %v827 = vpack.c.bf16 %v812, %v811
        %v828 = vpack.c.bf16 %v814, %v813
        %v829 = vpack.c.bf16 %v816, %v815
        %v830 = vpack.c.bf16 %v818, %v817
        %vm831 = vcmask 3072
        %832 = vst.msk [vmem:[#allocation3] sm:$0xf] %vm831, 0
        %833 = vst.msk [vmem:[#allocation3 + $0x4] sm:$0xf] %vm831, 0
        %834 = vst.msk [vmem:[#allocation3 + $0x8] sm:$0xf] %vm831, 0
        %835 = vst.msk [vmem:[#allocation3 + $0xc] sm:$0xf] %vm831, 0
        %836 = vst.msk [vmem:[#allocation3 + $0x10] sm:$0xf] %vm831, 0
        %837 = vst.msk [vmem:[#allocation3 + $0x14] sm:$0xf] %vm831, 0
        %838 = vst.msk [vmem:[#allocation3 + $0x18] sm:$0xf] %vm831, 0
        %839 = vst.msk [vmem:[#allocation3 + $0x1c] sm:$0xf] %vm831, 0
        %v844 = vunpack.c.l.b16 %v827
        %v845 = vunpack.c.h.b16 %v827
        %v846 = vunpack.c.l.b16 %v828
        %v847 = vunpack.c.h.b16 %v828
        %v848 = vunpack.c.l.b16 %v829
        %v849 = vunpack.c.h.b16 %v829
        %v850 = vunpack.c.l.b16 %v830
        %v851 = vunpack.c.h.b16 %v830
        %v852 = vpack.c.b16 %v844, %v844
        %v853 = vpack.c.b16 %v845, %v845
        %v854 = vpack.c.b16 %v846, %v846
        %v855 = vpack.c.b16 %v847, %v847
        %v856 = vpack.c.b16 %v848, %v848
        %v857 = vpack.c.b16 %v849, %v849
        %v858 = vpack.c.b16 %v850, %v850
        %v859 = vpack.c.b16 %v851, %v851
        %860 = vrot.lane.b32.xlu0 %v852, 1
        %v861 = vpop.permute.xlu0 %860
        %862 = vrot.lane.b32.xlu0 %v853, 1
        %v863 = vpop.permute.xlu0 %862
        %864 = vrot.lane.b32.xlu0 %v854, 1
        %v865 = vpop.permute.xlu0 %864
        %866 = vrot.lane.b32.xlu0 %v855, 1
        %v867 = vpop.permute.xlu0 %866
        %868 = vrot.lane.b32.xlu0 %v856, 1
        %v869 = vpop.permute.xlu0 %868
        %870 = vrot.lane.b32.xlu0 %v857, 1
        %v871 = vpop.permute.xlu0 %870
        %872 = vrot.lane.b32.xlu0 %v858, 1
        %v873 = vpop.permute.xlu0 %872
        %874 = vrot.lane.b32.xlu0 %v859, 1
        %v875 = vpop.permute.xlu0 %874
        %vm884 = vcmask 306184
        %885 = vst.msk [vmem:[#allocation3] sm:$0xf] %vm884, %v861
        %886 = vst.msk [vmem:[#allocation3 + $0x4] sm:$0xf] %vm884, %v863
        %887 = vst.msk [vmem:[#allocation3 + $0x8] sm:$0xf] %vm884, %v865
        %888 = vst.msk [vmem:[#allocation3 + $0xc] sm:$0xf] %vm884, %v867
        %889 = vst.msk [vmem:[#allocation3 + $0x10] sm:$0xf] %vm884, %v869
        %890 = vst.msk [vmem:[#allocation3 + $0x14] sm:$0xf] %vm884, %v871
        %891 = vst.msk [vmem:[#allocation3 + $0x18] sm:$0xf] %vm884, %v873
        %892 = vst.msk [vmem:[#allocation3 + $0x1c] sm:$0xf] %vm884, %v875
        %vm901 = vcmask 306176
        %902 = vst.msk [vmem:[#allocation3 + $0x20] sm:$0xf] %vm901, %v852
        %903 = vst.msk [vmem:[#allocation3 + $0x24] sm:$0xf] %vm901, %v853
        %904 = vst.msk [vmem:[#allocation3 + $0x28] sm:$0xf] %vm901, %v854
        %905 = vst.msk [vmem:[#allocation3 + $0x2c] sm:$0xf] %vm901, %v855
        %906 = vst.msk [vmem:[#allocation3 + $0x30] sm:$0xf] %vm901, %v856
        %907 = vst.msk [vmem:[#allocation3 + $0x34] sm:$0xf] %vm901, %v857
        %908 = vst.msk [vmem:[#allocation3 + $0x38] sm:$0xf] %vm901, %v858
        %909 = vst.msk [vmem:[#allocation3 + $0x3c] sm:$0xf] %vm901, %v859
        %910 = vrot.lane.b32.xlu0 %v852, 127
        %v911 = vpop.permute.xlu0 %910
        %912 = vrot.lane.b32.xlu0 %v853, 127
        %v913 = vpop.permute.xlu0 %912
        %914 = vrot.lane.b32.xlu0 %v854, 127
        %v915 = vpop.permute.xlu0 %914
        %916 = vrot.lane.b32.xlu0 %v855, 127
        %v917 = vpop.permute.xlu0 %916
        %918 = vrot.lane.b32.xlu0 %v856, 127
        %v919 = vpop.permute.xlu0 %918
        %920 = vrot.lane.b32.xlu0 %v857, 127
        %v921 = vpop.permute.xlu0 %920
        %922 = vrot.lane.b32.xlu0 %v858, 127
        %v923 = vpop.permute.xlu0 %922
        %924 = vrot.lane.b32.xlu0 %v859, 127
        %v925 = vpop.permute.xlu0 %924
        %vm934 = vcmask 297984
        %935 = vst.msk [vmem:[#allocation3 + $0x40] sm:$0xf] %vm934, %v911
        %936 = vst.msk [vmem:[#allocation3 + $0x44] sm:$0xf] %vm934, %v913
        %937 = vst.msk [vmem:[#allocation3 + $0x48] sm:$0xf] %vm934, %v915
        %938 = vst.msk [vmem:[#allocation3 + $0x4c] sm:$0xf] %vm934, %v917
        %939 = vst.msk [vmem:[#allocation3 + $0x50] sm:$0xf] %vm934, %v919
        %940 = vst.msk [vmem:[#allocation3 + $0x54] sm:$0xf] %vm934, %v921
        %941 = vst.msk [vmem:[#allocation3 + $0x58] sm:$0xf] %vm934, %v923
        %942 = vst.msk [vmem:[#allocation3 + $0x5c] sm:$0xf] %vm934, %v925
        %vm943 = vcmask 306472
        %944 = vst.msk [vmem:[#allocation3 + $0x40] sm:$0xf] %vm943, 0
        %945 = vst.msk [vmem:[#allocation3 + $0x44] sm:$0xf] %vm943, 0
        %946 = vst.msk [vmem:[#allocation3 + $0x48] sm:$0xf] %vm943, 0
        %947 = vst.msk [vmem:[#allocation3 + $0x4c] sm:$0xf] %vm943, 0
        %948 = vst.msk [vmem:[#allocation3 + $0x50] sm:$0xf] %vm943, 0
        %949 = vst.msk [vmem:[#allocation3 + $0x54] sm:$0xf] %vm943, 0
        %950 = vst.msk [vmem:[#allocation3 + $0x58] sm:$0xf] %vm943, 0
        %951 = vst.msk [vmem:[#allocation3 + $0x5c] sm:$0xf] %vm943, 0
        %v952 = vld [vmem:[#allocation3] sm:$0xf]
        %v953 = vld [vmem:[#allocation3 + $0x4] sm:$0xf]
        %v954 = vld [vmem:[#allocation3 + $0x8] sm:$0xf]
        %v955 = vld [vmem:[#allocation3 + $0xc] sm:$0xf]
        %v956 = vld [vmem:[#allocation3 + $0x10] sm:$0xf]
        %v957 = vld [vmem:[#allocation3 + $0x14] sm:$0xf]
        %v958 = vld [vmem:[#allocation3 + $0x18] sm:$0xf]
        %v959 = vld [vmem:[#allocation3 + $0x1c] sm:$0xf]
        %v960 = vld [vmem:[#allocation3 + $0x20] sm:$0xf]
        %v961 = vld [vmem:[#allocation3 + $0x24] sm:$0xf]
        %v962 = vld [vmem:[#allocation3 + $0x28] sm:$0xf]
        %v963 = vld [vmem:[#allocation3 + $0x2c] sm:$0xf]
        %v964 = vld [vmem:[#allocation3 + $0x30] sm:$0xf]
        %v965 = vld [vmem:[#allocation3 + $0x34] sm:$0xf]
        %v966 = vld [vmem:[#allocation3 + $0x38] sm:$0xf]
        %v967 = vld [vmem:[#allocation3 + $0x3c] sm:$0xf]
        %v968 = vld [vmem:[#allocation3 + $0x40] sm:$0xf]
        %v969 = vld [vmem:[#allocation3 + $0x44] sm:$0xf]
        %v970 = vld [vmem:[#allocation3 + $0x48] sm:$0xf]
        %v971 = vld [vmem:[#allocation3 + $0x4c] sm:$0xf]
        %v972 = vld [vmem:[#allocation3 + $0x50] sm:$0xf]
        %v973 = vld [vmem:[#allocation3 + $0x54] sm:$0xf]
        %v974 = vld [vmem:[#allocation3 + $0x58] sm:$0xf]
        %v975 = vld [vmem:[#allocation3 + $0x5c] sm:$0xf]
        %v976 = vld [vmem:[%s4] sm:$0xff]
        %v977 = vld [vmem:[%s4 + $0x8] sm:$0xff]
        %v978 = vld [vmem:[%s4 + $0x10] sm:$0xff]
        %v979 = vld [vmem:[%s4 + $0x18] sm:$0xff]
        %v980 = vld [vmem:[%s4 + $0x20] sm:$0xff]
        %v981 = vld [vmem:[%s4 + $0x28] sm:$0xff]
        %v982 = vld [vmem:[%s4 + $0x30] sm:$0xff]
        %v983 = vld [vmem:[%s4 + $0x38] sm:$0xff]
        %985 = vset.pattern.permute.xlu0 0
        %986 = vperm.xlu0 %985, %v976
        %v987 = vpop.permute.xlu0 %986
        %990 = vset.pattern.permute.xlu0 0
        %991 = vperm.xlu0 %990, %v977
        %v992 = vpop.permute.xlu0 %991
        %995 = vset.pattern.permute.xlu0 0
        %996 = vperm.xlu0 %995, %v978
        %v997 = vpop.permute.xlu0 %996
        %1000 = vset.pattern.permute.xlu0 0
        %1001 = vperm.xlu0 %1000, %v979
        %v1002 = vpop.permute.xlu0 %1001
        %1005 = vset.pattern.permute.xlu0 0
        %1006 = vperm.xlu0 %1005, %v980
        %v1007 = vpop.permute.xlu0 %1006
        %1010 = vset.pattern.permute.xlu0 0
        %1011 = vperm.xlu0 %1010, %v981
        %v1012 = vpop.permute.xlu0 %1011
        %1015 = vset.pattern.permute.xlu0 0
        %1016 = vperm.xlu0 %1015, %v982
        %v1017 = vpop.permute.xlu0 %1016
        %1020 = vset.pattern.permute.xlu0 0
        %1021 = vperm.xlu0 %1020, %v983
        %v1022 = vpop.permute.xlu0 %1021
        %v1032 = vunpack.c.l.b16 %v819
        %v1033 = vunpack.c.h.b16 %v819
        %v1034 = vunpack.c.l.b16 %v820
        %v1035 = vunpack.c.h.b16 %v820
        %v1036 = vunpack.c.l.b16 %v821
        %v1037 = vunpack.c.h.b16 %v821
        %v1038 = vunpack.c.l.b16 %v822
        %v1039 = vunpack.c.h.b16 %v822
        %v1040 = vunpack.c.l.b16 %v823
        %v1041 = vunpack.c.h.b16 %v823
        %v1042 = vunpack.c.l.b16 %v824
        %v1043 = vunpack.c.h.b16 %v824
        %v1044 = vunpack.c.l.b16 %v825
        %v1045 = vunpack.c.h.b16 %v825
        %v1046 = vunpack.c.l.b16 %v826
        %v1047 = vunpack.c.h.b16 %v826
        %v1048 = vpack.c.b16 %v1034, %v1032
        %v1049 = vpack.c.b16 %v1035, %v1033
        %v1050 = vpack.c.b16 %v1038, %v1036
        %v1051 = vpack.c.b16 %v1039, %v1037
        %v1052 = vpack.c.b16 %v1042, %v1040
        %v1053 = vpack.c.b16 %v1043, %v1041
        %v1054 = vpack.c.b16 %v1046, %v1044
        %v1055 = vpack.c.b16 %v1047, %v1045
        %v1084 = vunpack.c.l.b16 %v952
        %v1085 = vunpack.c.l.b16 %v953
        %v1086 = vunpack.c.l.b16 %v954
        %v1087 = vunpack.c.l.b16 %v955
        %v1088 = vunpack.c.l.b16 %v956
        %v1089 = vunpack.c.l.b16 %v957
        %v1090 = vunpack.c.l.b16 %v958
        %v1091 = vunpack.c.l.b16 %v959
        %v1092 = vunpack.c.l.b16 %v960
        %v1093 = vunpack.c.l.b16 %v961
        %v1094 = vunpack.c.l.b16 %v962
        %v1095 = vunpack.c.l.b16 %v963
        %v1096 = vunpack.c.l.b16 %v964
        %v1097 = vunpack.c.l.b16 %v965
        %v1098 = vunpack.c.l.b16 %v966
        %v1099 = vunpack.c.l.b16 %v967
        %v1100 = vunpack.c.l.b16 %v968
        %v1101 = vunpack.c.l.b16 %v969
        %v1102 = vunpack.c.l.b16 %v970
        %v1103 = vunpack.c.l.b16 %v971
        %v1104 = vunpack.c.l.b16 %v972
        %v1105 = vunpack.c.l.b16 %v973
        %v1106 = vunpack.c.l.b16 %v974
        %v1107 = vunpack.c.l.b16 %v975
        %v1108 = vpack.c.b16 %v1085, %v1084
        %v1109 = vpack.c.b16 %v1087, %v1086
        %v1110 = vpack.c.b16 %v1089, %v1088
        %v1111 = vpack.c.b16 %v1091, %v1090
        %v1112 = vpack.c.b16 %v1093, %v1092
        %v1113 = vpack.c.b16 %v1095, %v1094
        %v1114 = vpack.c.b16 %v1097, %v1096
        %v1115 = vpack.c.b16 %v1099, %v1098
        %v1116 = vpack.c.b16 %v1101, %v1100
        %v1117 = vpack.c.b16 %v1103, %v1102
        %v1118 = vpack.c.b16 %v1105, %v1104
        %v1119 = vpack.c.b16 %v1107, %v1106
        %vm1132 = vcmask 523264
        %v1134 = vsel %vm1132, %v1049, 0
        %v1137 = vsel %vm1132, %v1051, 0
        %v1140 = vsel %vm1132, %v1053, 0
        %v1143 = vsel %vm1132, %v1055, 0
        %1145 = vmatprep.subr.bf16.mxu0 0
        %1146 = vmatpush1.bf16.msra.mxu0 %v1115
        %1147 = vmatprep.subr.bf16.mxu0 0
        %1148 = vmatpush1.bf16.msra.mxu0 %v1114
        %1149 = vmatprep.subr.bf16.mxu0 0
        %1150 = vmatpush1.bf16.msra.mxu0 %v1113
        %1151 = vmatprep.subr.bf16.mxu0 0
        %1152 = vmatpush1.bf16.msra.mxu0 %v1112
        %1153 = vmatprep.subr.bf16.mxu0 0
        %1154 = vmatpush1.bf16.msra.mxu0 %v1111
        %1155 = vmatprep.subr.bf16.mxu0 0
        %1156 = vmatpush1.bf16.msra.mxu0 %v1110
        %1157 = vmatprep.subr.bf16.mxu0 0
        %1158 = vmatpush1.bf16.msra.mxu0 %v1109
        %1159 = vmatprep.subr.bf16.mxu0 0
        %1160 = vmatpush1.bf16.msra.mxu0 %v1108
        %1161 = vmatprep.subr.bf16.mxu0 0
        %1162 = vmatpush2.bf16.msra.mxu0 0
        %1163 = vmatprep.subr.bf16.mxu0 0
        %1164 = vmatpush2.bf16.msra.mxu0 0
        %1165 = vmatprep.subr.bf16.mxu0 0
        %1166 = vmatpush2.bf16.msra.mxu0 0
        %1167 = vmatprep.subr.bf16.mxu0 0
        %1168 = vmatpush2.bf16.msra.mxu0 0
        %1169 = vmatprep.subr.bf16.mxu0 0
        %1170 = vmatpush2.bf16.msra.mxu0 %v1119
        %1171 = vmatprep.subr.bf16.mxu0 0
        %1172 = vmatpush2.bf16.msra.mxu0 %v1118
        %1173 = vmatprep.subr.bf16.mxu0 0
        %1174 = vmatpush2.bf16.msra.mxu0 %v1117
        %1175 = vmatprep.subr.bf16.mxu0 0
        %1176 = vmatpush2.bf16.msra.mxu0 %v1116
        %1177 = vmatprep.mubr.bf16.mxu0 %v1134
        %1178 = vmatmul.mubr.bf16.gmra.mxu0 %v1048
        %v1179 = vpop.f32.mrf.mxu0
        %v1180 = vadd.f32 %v987, %v1179
        %v1181 = vpop.f32.mrf.mxu0
        %v1182 = vpop.f32.mrf.mxu0
        %v1183 = vadd.f32 %v992, %v1182
        %v1184 = vpop.f32.mrf.mxu0
        %1185 = vmatprep.mubr.bf16.mxu0 %v1137
        %1186 = vmatmul.mubr.bf16.gmra.mxu0 %v1050
        %v1187 = vpop.f32.mrf.mxu0
        %v1188 = vadd.f32 %v997, %v1187
        %v1189 = vpop.f32.mrf.mxu0
        %v1190 = vpop.f32.mrf.mxu0
        %v1191 = vadd.f32 %v1002, %v1190
        %v1192 = vpop.f32.mrf.mxu0
        %1193 = vmatprep.mubr.bf16.mxu0 %v1140
        %1194 = vmatmul.mubr.bf16.gmra.mxu0 %v1052
        %v1195 = vpop.f32.mrf.mxu0
        %v1196 = vadd.f32 %v1007, %v1195
        %v1197 = vpop.f32.mrf.mxu0
        %v1198 = vpop.f32.mrf.mxu0
        %v1199 = vadd.f32 %v1012, %v1198
        %v1200 = vpop.f32.mrf.mxu0
        %1201 = vmatprep.mubr.bf16.mxu0 %v1143
        %1202 = vmatmul.mubr.bf16.gmra.mxu0 %v1054
        %v1203 = vpop.f32.mrf.mxu0
        %v1204 = vadd.f32 %v1017, %v1203
        %v1205 = vpop.f32.mrf.mxu0
        %v1206 = vpop.f32.mrf.mxu0
        %v1207 = vadd.f32 %v1022, %v1206
        %v1208 = vpop.f32.mrf.mxu0
        %1209 = vdwg.mxu0
        %v1210 = vmax.f32 %v1180, 0.0
        %v1211 = vmax.f32 %v1183, 0.0
        %v1212 = vmax.f32 %v1188, 0.0
        %v1213 = vmax.f32 %v1191, 0.0
        %v1214 = vmax.f32 %v1196, 0.0
        %v1215 = vmax.f32 %v1199, 0.0
        %v1216 = vmax.f32 %v1204, 0.0
        %v1217 = vmax.f32 %v1207, 0.0
        %1226 = vrot.lane.b32.xlu0 %v1210, 127
        %v1227 = vpop.permute.xlu0 %1226
        %1228 = vrot.lane.b32.xlu0 %v1211, 127
        %v1229 = vpop.permute.xlu0 %1228
        %1230 = vrot.lane.b32.xlu0 %v1212, 127
        %v1231 = vpop.permute.xlu0 %1230
        %1232 = vrot.lane.b32.xlu0 %v1213, 127
        %v1233 = vpop.permute.xlu0 %1232
        %1234 = vrot.lane.b32.xlu0 %v1214, 127
        %v1235 = vpop.permute.xlu0 %1234
        %1236 = vrot.lane.b32.xlu0 %v1215, 127
        %v1237 = vpop.permute.xlu0 %1236
        %1238 = vrot.lane.b32.xlu0 %v1216, 127
        %v1239 = vpop.permute.xlu0 %1238
        %1240 = vrot.lane.b32.xlu0 %v1217, 127
        %v1241 = vpop.permute.xlu0 %1240
        %v1250 = vmax.f32 %v1210, %v1227
        %v1251 = vmax.f32 %v1211, %v1229
        %v1252 = vmax.f32 %v1212, %v1231
        %v1253 = vmax.f32 %v1213, %v1233
        %v1254 = vmax.f32 %v1214, %v1235
        %v1255 = vmax.f32 %v1215, %v1237
        %v1256 = vmax.f32 %v1216, %v1239
        %v1257 = vmax.f32 %v1217, %v1241
        %1258 = vrot.lane.b32.xlu0 %v1210, 126
        %v1259 = vpop.permute.xlu0 %1258
        %1260 = vrot.lane.b32.xlu0 %v1211, 126
        %v1261 = vpop.permute.xlu0 %1260
        %1262 = vrot.lane.b32.xlu0 %v1212, 126
        %v1263 = vpop.permute.xlu0 %1262
        %1264 = vrot.lane.b32.xlu0 %v1213, 126
        %v1265 = vpop.permute.xlu0 %1264
        %1266 = vrot.lane.b32.xlu0 %v1214, 126
        %v1267 = vpop.permute.xlu0 %1266
        %1268 = vrot.lane.b32.xlu0 %v1215, 126
        %v1269 = vpop.permute.xlu0 %1268
        %1270 = vrot.lane.b32.xlu0 %v1216, 126
        %v1271 = vpop.permute.xlu0 %1270
        %1272 = vrot.lane.b32.xlu0 %v1217, 126
        %v1273 = vpop.permute.xlu0 %1272
        %v1282 = vmax.f32 %v1250, %v1259
        %v1283 = vmax.f32 %v1251, %v1261
        %v1284 = vmax.f32 %v1252, %v1263
        %v1285 = vmax.f32 %v1253, %v1265
        %v1286 = vmax.f32 %v1254, %v1267
        %v1287 = vmax.f32 %v1255, %v1269
        %v1288 = vmax.f32 %v1256, %v1271
        %v1289 = vmax.f32 %v1257, %v1273
        %v1290 = vpack.c.bf16 %v1283, %v1282
        %v1291 = vpack.c.bf16 %v1285, %v1284
        %v1292 = vpack.c.bf16 %v1287, %v1286
        %v1293 = vpack.c.bf16 %v1289, %v1288
        %1294 = vst.msk [vmem:[#allocation3] sm:$0xf] %vm831, 0
        %1295 = vst.msk [vmem:[#allocation3 + $0x4] sm:$0xf] %vm831, 0
        %1296 = vst.msk [vmem:[#allocation3 + $0x8] sm:$0xf] %vm831, 0
        %1297 = vst.msk [vmem:[#allocation3 + $0xc] sm:$0xf] %vm831, 0
        %1298 = vst.msk [vmem:[#allocation3 + $0x10] sm:$0xf] %vm831, 0
        %1299 = vst.msk [vmem:[#allocation3 + $0x14] sm:$0xf] %vm831, 0
        %1300 = vst.msk [vmem:[#allocation3 + $0x18] sm:$0xf] %vm831, 0
        %1301 = vst.msk [vmem:[#allocation3 + $0x1c] sm:$0xf] %vm831, 0
        %v1306 = vunpack.c.l.b16 %v1290
        %v1307 = vunpack.c.h.b16 %v1290
        %v1308 = vunpack.c.l.b16 %v1291
        %v1309 = vunpack.c.h.b16 %v1291
        %v1310 = vunpack.c.l.b16 %v1292
        %v1311 = vunpack.c.h.b16 %v1292
        %v1312 = vunpack.c.l.b16 %v1293
        %v1313 = vunpack.c.h.b16 %v1293
        %v1314 = vpack.c.b16 %v1306, %v1306
        %v1315 = vpack.c.b16 %v1307, %v1307
        %v1316 = vpack.c.b16 %v1308, %v1308
        %v1317 = vpack.c.b16 %v1309, %v1309
        %v1318 = vpack.c.b16 %v1310, %v1310
        %v1319 = vpack.c.b16 %v1311, %v1311
        %v1320 = vpack.c.b16 %v1312, %v1312
        %v1321 = vpack.c.b16 %v1313, %v1313
        %1322 = vrot.lane.b32.xlu0 %v1314, 1
        %v1323 = vpop.permute.xlu0 %1322
        %1324 = vrot.lane.b32.xlu0 %v1315, 1
        %v1325 = vpop.permute.xlu0 %1324
        %1326 = vrot.lane.b32.xlu0 %v1316, 1
        %v1327 = vpop.permute.xlu0 %1326
        %1328 = vrot.lane.b32.xlu0 %v1317, 1
        %v1329 = vpop.permute.xlu0 %1328
        %1330 = vrot.lane.b32.xlu0 %v1318, 1
        %v1331 = vpop.permute.xlu0 %1330
        %1332 = vrot.lane.b32.xlu0 %v1319, 1
        %v1333 = vpop.permute.xlu0 %1332
        %1334 = vrot.lane.b32.xlu0 %v1320, 1
        %v1335 = vpop.permute.xlu0 %1334
        %1336 = vrot.lane.b32.xlu0 %v1321, 1
        %v1337 = vpop.permute.xlu0 %1336
        %vm1346 = vcmask 289800
        %1347 = vst.msk [vmem:[#allocation3] sm:$0xf] %vm1346, %v1323
        %1348 = vst.msk [vmem:[#allocation3 + $0x4] sm:$0xf] %vm1346, %v1325
        %1349 = vst.msk [vmem:[#allocation3 + $0x8] sm:$0xf] %vm1346, %v1327
        %1350 = vst.msk [vmem:[#allocation3 + $0xc] sm:$0xf] %vm1346, %v1329
        %1351 = vst.msk [vmem:[#allocation3 + $0x10] sm:$0xf] %vm1346, %v1331
        %1352 = vst.msk [vmem:[#allocation3 + $0x14] sm:$0xf] %vm1346, %v1333
        %1353 = vst.msk [vmem:[#allocation3 + $0x18] sm:$0xf] %vm1346, %v1335
        %1354 = vst.msk [vmem:[#allocation3 + $0x1c] sm:$0xf] %vm1346, %v1337
        %vm1363 = vcmask 289792
        %1364 = vst.msk [vmem:[#allocation3 + $0x20] sm:$0xf] %vm1363, %v1314
        %1365 = vst.msk [vmem:[#allocation3 + $0x24] sm:$0xf] %vm1363, %v1315
        %1366 = vst.msk [vmem:[#allocation3 + $0x28] sm:$0xf] %vm1363, %v1316
        %1367 = vst.msk [vmem:[#allocation3 + $0x2c] sm:$0xf] %vm1363, %v1317
        %1368 = vst.msk [vmem:[#allocation3 + $0x30] sm:$0xf] %vm1363, %v1318
        %1369 = vst.msk [vmem:[#allocation3 + $0x34] sm:$0xf] %vm1363, %v1319
        %1370 = vst.msk [vmem:[#allocation3 + $0x38] sm:$0xf] %vm1363, %v1320
        %1371 = vst.msk [vmem:[#allocation3 + $0x3c] sm:$0xf] %vm1363, %v1321
        %1372 = vrot.lane.b32.xlu0 %v1314, 127
        %v1373 = vpop.permute.xlu0 %1372
        %1374 = vrot.lane.b32.xlu0 %v1315, 127
        %v1375 = vpop.permute.xlu0 %1374
        %1376 = vrot.lane.b32.xlu0 %v1316, 127
        %v1377 = vpop.permute.xlu0 %1376
        %1378 = vrot.lane.b32.xlu0 %v1317, 127
        %v1379 = vpop.permute.xlu0 %1378
        %1380 = vrot.lane.b32.xlu0 %v1318, 127
        %v1381 = vpop.permute.xlu0 %1380
        %1382 = vrot.lane.b32.xlu0 %v1319, 127
        %v1383 = vpop.permute.xlu0 %1382
        %1384 = vrot.lane.b32.xlu0 %v1320, 127
        %v1385 = vpop.permute.xlu0 %1384
        %1386 = vrot.lane.b32.xlu0 %v1321, 127
        %v1387 = vpop.permute.xlu0 %1386
        %vm1396 = vcmask 281600
        %1397 = vst.msk [vmem:[#allocation3 + $0x40] sm:$0xf] %vm1396, %v1373
        %1398 = vst.msk [vmem:[#allocation3 + $0x44] sm:$0xf] %vm1396, %v1375
        %1399 = vst.msk [vmem:[#allocation3 + $0x48] sm:$0xf] %vm1396, %v1377
        %1400 = vst.msk [vmem:[#allocation3 + $0x4c] sm:$0xf] %vm1396, %v1379
        %1401 = vst.msk [vmem:[#allocation3 + $0x50] sm:$0xf] %vm1396, %v1381
        %1402 = vst.msk [vmem:[#allocation3 + $0x54] sm:$0xf] %vm1396, %v1383
        %1403 = vst.msk [vmem:[#allocation3 + $0x58] sm:$0xf] %vm1396, %v1385
        %1404 = vst.msk [vmem:[#allocation3 + $0x5c] sm:$0xf] %vm1396, %v1387
        %vm1405 = vcmask 290072
        %1406 = vst.msk [vmem:[#allocation3 + $0x40] sm:$0xf] %vm1405, 0
        %1407 = vst.msk [vmem:[#allocation3 + $0x44] sm:$0xf] %vm1405, 0
        %1408 = vst.msk [vmem:[#allocation3 + $0x48] sm:$0xf] %vm1405, 0
        %1409 = vst.msk [vmem:[#allocation3 + $0x4c] sm:$0xf] %vm1405, 0
        %1410 = vst.msk [vmem:[#allocation3 + $0x50] sm:$0xf] %vm1405, 0
        %1411 = vst.msk [vmem:[#allocation3 + $0x54] sm:$0xf] %vm1405, 0
        %1412 = vst.msk [vmem:[#allocation3 + $0x58] sm:$0xf] %vm1405, 0
        %1413 = vst.msk [vmem:[#allocation3 + $0x5c] sm:$0xf] %vm1405, 0
        %v1414 = vld [vmem:[#allocation3] sm:$0xf]
        %v1415 = vld [vmem:[#allocation3 + $0x4] sm:$0xf]
        %v1416 = vld [vmem:[#allocation3 + $0x8] sm:$0xf]
        %v1417 = vld [vmem:[#allocation3 + $0xc] sm:$0xf]
        %v1418 = vld [vmem:[#allocation3 + $0x10] sm:$0xf]
        %v1419 = vld [vmem:[#allocation3 + $0x14] sm:$0xf]
        %v1420 = vld [vmem:[#allocation3 + $0x18] sm:$0xf]
        %v1421 = vld [vmem:[#allocation3 + $0x1c] sm:$0xf]
        %v1422 = vld [vmem:[#allocation3 + $0x20] sm:$0xf]
        %v1423 = vld [vmem:[#allocation3 + $0x24] sm:$0xf]
        %v1424 = vld [vmem:[#allocation3 + $0x28] sm:$0xf]
        %v1425 = vld [vmem:[#allocation3 + $0x2c] sm:$0xf]
        %v1426 = vld [vmem:[#allocation3 + $0x30] sm:$0xf]
        %v1427 = vld [vmem:[#allocation3 + $0x34] sm:$0xf]
        %v1428 = vld [vmem:[#allocation3 + $0x38] sm:$0xf]
        %v1429 = vld [vmem:[#allocation3 + $0x3c] sm:$0xf]
        %v1430 = vld [vmem:[#allocation3 + $0x40] sm:$0xf]
        %v1431 = vld [vmem:[#allocation3 + $0x44] sm:$0xf]
        %v1432 = vld [vmem:[#allocation3 + $0x48] sm:$0xf]
        %v1433 = vld [vmem:[#allocation3 + $0x4c] sm:$0xf]
        %v1434 = vld [vmem:[#allocation3 + $0x50] sm:$0xf]
        %v1435 = vld [vmem:[#allocation3 + $0x54] sm:$0xf]
        %v1436 = vld [vmem:[#allocation3 + $0x58] sm:$0xf]
        %v1437 = vld [vmem:[#allocation3 + $0x5c] sm:$0xf]
        %v1438 = vld [vmem:[%s4] sm:$0xff]
        %v1439 = vld [vmem:[%s4 + $0x8] sm:$0xff]
        %v1440 = vld [vmem:[%s4 + $0x10] sm:$0xff]
        %v1441 = vld [vmem:[%s4 + $0x18] sm:$0xff]
        %v1442 = vld [vmem:[%s4 + $0x20] sm:$0xff]
        %v1443 = vld [vmem:[%s4 + $0x28] sm:$0xff]
        %v1444 = vld [vmem:[%s4 + $0x30] sm:$0xff]
        %v1445 = vld [vmem:[%s4 + $0x38] sm:$0xff]
        %1447 = vset.pattern.permute.xlu0 0
        %1448 = vperm.xlu0 %1447, %v1438
        %v1449 = vpop.permute.xlu0 %1448
        %1452 = vset.pattern.permute.xlu0 0
        %1453 = vperm.xlu0 %1452, %v1439
        %v1454 = vpop.permute.xlu0 %1453
        %1457 = vset.pattern.permute.xlu0 0
        %1458 = vperm.xlu0 %1457, %v1440
        %v1459 = vpop.permute.xlu0 %1458
        %1462 = vset.pattern.permute.xlu0 0
        %1463 = vperm.xlu0 %1462, %v1441
        %v1464 = vpop.permute.xlu0 %1463
        %1467 = vset.pattern.permute.xlu0 0
        %1468 = vperm.xlu0 %1467, %v1442
        %v1469 = vpop.permute.xlu0 %1468
        %1472 = vset.pattern.permute.xlu0 0
        %1473 = vperm.xlu0 %1472, %v1443
        %v1474 = vpop.permute.xlu0 %1473
        %1477 = vset.pattern.permute.xlu0 0
        %1478 = vperm.xlu0 %1477, %v1444
        %v1479 = vpop.permute.xlu0 %1478
        %1482 = vset.pattern.permute.xlu0 0
        %1483 = vperm.xlu0 %1482, %v1445
        %v1484 = vpop.permute.xlu0 %1483
        %v1510 = vunpack.c.l.b16 %v1414
        %v1511 = vunpack.c.l.b16 %v1415
        %v1512 = vunpack.c.l.b16 %v1416
        %v1513 = vunpack.c.l.b16 %v1417
        %v1514 = vunpack.c.l.b16 %v1418
        %v1515 = vunpack.c.l.b16 %v1419
        %v1516 = vunpack.c.l.b16 %v1420
        %v1517 = vunpack.c.l.b16 %v1421
        %v1518 = vunpack.c.l.b16 %v1422
        %v1519 = vunpack.c.l.b16 %v1423
        %v1520 = vunpack.c.l.b16 %v1424
        %v1521 = vunpack.c.l.b16 %v1425
        %v1522 = vunpack.c.l.b16 %v1426
        %v1523 = vunpack.c.l.b16 %v1427
        %v1524 = vunpack.c.l.b16 %v1428
        %v1525 = vunpack.c.l.b16 %v1429
        %v1526 = vunpack.c.l.b16 %v1430
        %v1527 = vunpack.c.l.b16 %v1431
        %v1528 = vunpack.c.l.b16 %v1432
        %v1529 = vunpack.c.l.b16 %v1433
        %v1530 = vunpack.c.l.b16 %v1434
        %v1531 = vunpack.c.l.b16 %v1435
        %v1532 = vunpack.c.l.b16 %v1436
        %v1533 = vunpack.c.l.b16 %v1437
        %v1534 = vpack.c.b16 %v1511, %v1510
        %v1535 = vpack.c.b16 %v1513, %v1512
        %v1536 = vpack.c.b16 %v1515, %v1514
        %v1537 = vpack.c.b16 %v1517, %v1516
        %v1538 = vpack.c.b16 %v1519, %v1518
        %v1539 = vpack.c.b16 %v1521, %v1520
        %v1540 = vpack.c.b16 %v1523, %v1522
        %v1541 = vpack.c.b16 %v1525, %v1524
        %v1542 = vpack.c.b16 %v1527, %v1526
        %v1543 = vpack.c.b16 %v1529, %v1528
        %v1544 = vpack.c.b16 %v1531, %v1530
        %v1545 = vpack.c.b16 %v1533, %v1532
        %1558 = vmatprep.subr.bf16.mxu0 0
        %1559 = vmatpush1.bf16.msra.mxu0 %v1541
        %1560 = vmatprep.subr.bf16.mxu0 0
        %1561 = vmatpush1.bf16.msra.mxu0 %v1540
        %1562 = vmatprep.subr.bf16.mxu0 0
        %1563 = vmatpush1.bf16.msra.mxu0 %v1539
        %1564 = vmatprep.subr.bf16.mxu0 0
        %1565 = vmatpush1.bf16.msra.mxu0 %v1538
        %1566 = vmatprep.subr.bf16.mxu0 0
        %1567 = vmatpush1.bf16.msra.mxu0 %v1537
        %1568 = vmatprep.subr.bf16.mxu0 0
        %1569 = vmatpush1.bf16.msra.mxu0 %v1536
        %1570 = vmatprep.subr.bf16.mxu0 0
        %1571 = vmatpush1.bf16.msra.mxu0 %v1535
        %1572 = vmatprep.subr.bf16.mxu0 0
        %1573 = vmatpush1.bf16.msra.mxu0 %v1534
        %1574 = vmatprep.subr.bf16.mxu0 0
        %1575 = vmatpush2.bf16.msra.mxu0 0
        %1576 = vmatprep.subr.bf16.mxu0 0
        %1577 = vmatpush2.bf16.msra.mxu0 0
        %1578 = vmatprep.subr.bf16.mxu0 0
        %1579 = vmatpush2.bf16.msra.mxu0 0
        %1580 = vmatprep.subr.bf16.mxu0 0
        %1581 = vmatpush2.bf16.msra.mxu0 0
        %1582 = vmatprep.subr.bf16.mxu0 0
        %1583 = vmatpush2.bf16.msra.mxu0 %v1545
        %1584 = vmatprep.subr.bf16.mxu0 0
        %1585 = vmatpush2.bf16.msra.mxu0 %v1544
        %1586 = vmatprep.subr.bf16.mxu0 0
        %1587 = vmatpush2.bf16.msra.mxu0 %v1543
        %1588 = vmatprep.subr.bf16.mxu0 0
        %1589 = vmatpush2.bf16.msra.mxu0 %v1542
        %1590 = vmatprep.mubr.bf16.mxu0 %v1134
        %1591 = vmatmul.mubr.bf16.gmra.mxu0 %v1048
        %v1592 = vpop.f32.mrf.mxu0
        %v1593 = vadd.f32 %v1449, %v1592
        %v1594 = vpop.f32.mrf.mxu0
        %v1595 = vpop.f32.mrf.mxu0
        %v1596 = vadd.f32 %v1454, %v1595
        %v1597 = vpop.f32.mrf.mxu0
        %1598 = vmatprep.mubr.bf16.mxu0 %v1137
        %1599 = vmatmul.mubr.bf16.gmra.mxu0 %v1050
        %v1600 = vpop.f32.mrf.mxu0
        %v1601 = vadd.f32 %v1459, %v1600
        %v1602 = vpop.f32.mrf.mxu0
        %v1603 = vpop.f32.mrf.mxu0
        %v1604 = vadd.f32 %v1464, %v1603
        %v1605 = vpop.f32.mrf.mxu0
        %1606 = vmatprep.mubr.bf16.mxu0 %v1140
        %1607 = vmatmul.mubr.bf16.gmra.mxu0 %v1052
        %v1608 = vpop.f32.mrf.mxu0
        %v1609 = vadd.f32 %v1469, %v1608
        %v1610 = vpop.f32.mrf.mxu0
        %v1611 = vpop.f32.mrf.mxu0
        %v1612 = vadd.f32 %v1474, %v1611
        %v1613 = vpop.f32.mrf.mxu0
        %1614 = vmatprep.mubr.bf16.mxu0 %v1143
        %1615 = vmatmul.mubr.bf16.gmra.mxu0 %v1054
        %v1616 = vpop.f32.mrf.mxu0
        %v1617 = vadd.f32 %v1479, %v1616
        %v1618 = vpop.f32.mrf.mxu0
        %v1619 = vpop.f32.mrf.mxu0
        %v1620 = vadd.f32 %v1484, %v1619
        %v1621 = vpop.f32.mrf.mxu0
        %1622 = vdwg.mxu0
        %v1623 = vmax.f32 %v1593, 0.0
        %v1624 = vmax.f32 %v1596, 0.0
        %v1625 = vmax.f32 %v1601, 0.0
        %v1626 = vmax.f32 %v1604, 0.0
        %v1627 = vmax.f32 %v1609, 0.0
        %v1628 = vmax.f32 %v1612, 0.0
        %v1629 = vmax.f32 %v1617, 0.0
        %v1630 = vmax.f32 %v1620, 0.0
        %1639 = vrot.lane.b32.xlu0 %v1623, 127
        %v1640 = vpop.permute.xlu0 %1639
        %1641 = vrot.lane.b32.xlu0 %v1624, 127
        %v1642 = vpop.permute.xlu0 %1641
        %1643 = vrot.lane.b32.xlu0 %v1625, 127
        %v1644 = vpop.permute.xlu0 %1643
        %1645 = vrot.lane.b32.xlu0 %v1626, 127
        %v1646 = vpop.permute.xlu0 %1645
        %1647 = vrot.lane.b32.xlu0 %v1627, 127
        %v1648 = vpop.permute.xlu0 %1647
        %1649 = vrot.lane.b32.xlu0 %v1628, 127
        %v1650 = vpop.permute.xlu0 %1649
        %1651 = vrot.lane.b32.xlu0 %v1629, 127
        %v1652 = vpop.permute.xlu0 %1651
        %1653 = vrot.lane.b32.xlu0 %v1630, 127
        %v1654 = vpop.permute.xlu0 %1653
        %v1663 = vmax.f32 %v1623, %v1640
        %v1664 = vmax.f32 %v1624, %v1642
        %v1665 = vmax.f32 %v1625, %v1644
        %v1666 = vmax.f32 %v1626, %v1646
        %v1667 = vmax.f32 %v1627, %v1648
        %v1668 = vmax.f32 %v1628, %v1650
        %v1669 = vmax.f32 %v1629, %v1652
        %v1670 = vmax.f32 %v1630, %v1654
        %1671 = vrot.lane.b32.xlu0 %v1623, 126
        %v1672 = vpop.permute.xlu0 %1671
        %1673 = vrot.lane.b32.xlu0 %v1624, 126
        %v1674 = vpop.permute.xlu0 %1673
        %1675 = vrot.lane.b32.xlu0 %v1625, 126
        %v1676 = vpop.permute.xlu0 %1675
        %1677 = vrot.lane.b32.xlu0 %v1626, 126
        %v1678 = vpop.permute.xlu0 %1677
        %1679 = vrot.lane.b32.xlu0 %v1627, 126
        %v1680 = vpop.permute.xlu0 %1679
        %1681 = vrot.lane.b32.xlu0 %v1628, 126
        %v1682 = vpop.permute.xlu0 %1681
        %1683 = vrot.lane.b32.xlu0 %v1629, 126
        %v1684 = vpop.permute.xlu0 %1683
        %1685 = vrot.lane.b32.xlu0 %v1630, 126
        %v1686 = vpop.permute.xlu0 %1685
        %v1695 = vmax.f32 %v1663, %v1672
        %v1696 = vmax.f32 %v1664, %v1674
        %v1697 = vmax.f32 %v1665, %v1676
        %v1698 = vmax.f32 %v1666, %v1678
        %v1699 = vmax.f32 %v1667, %v1680
        %v1700 = vmax.f32 %v1668, %v1682
        %v1701 = vmax.f32 %v1669, %v1684
        %v1702 = vmax.f32 %v1670, %v1686
        %vm1703 = vcmask 277504
        %v1704 = vsel %vm1703, %v1695, -inf
        %1705 = vmax.xlane.f32.xlu0 %v1704
        %v1706 = vpop.xlane.xlu0 %1705
        %v1707 = vsel %vm1703, %v1696, -inf
        %1708 = vmax.xlane.f32.xlu0 %v1707
        %v1709 = vpop.xlane.xlu0 %1708
        %v1710 = vsel %vm1703, %v1697, -inf
        %1711 = vmax.xlane.f32.xlu0 %v1710
        %v1712 = vpop.xlane.xlu0 %1711
        %v1713 = vsel %vm1703, %v1698, -inf
        %1714 = vmax.xlane.f32.xlu0 %v1713
        %v1715 = vpop.xlane.xlu0 %1714
        %v1716 = vsel %vm1703, %v1699, -inf
        %1717 = vmax.xlane.f32.xlu0 %v1716
        %v1718 = vpop.xlane.xlu0 %1717
        %v1719 = vsel %vm1703, %v1700, -inf
        %1720 = vmax.xlane.f32.xlu0 %v1719
        %v1721 = vpop.xlane.xlu0 %1720
        %v1722 = vsel %vm1703, %v1701, -inf
        %1723 = vmax.xlane.f32.xlu0 %v1722
        %v1724 = vpop.xlane.xlu0 %1723
        %v1725 = vsel %vm1703, %v1702, -inf
        %1726 = vmax.xlane.f32.xlu0 %v1725
        %v1727 = vpop.xlane.xlu0 %1726
        %v1728 = vld [vmem:[%s5] sm:$0xff]
        %v1729 = vld [vmem:[%s5 + $0x8] sm:$0xff]
        %v1730 = vld [vmem:[%s5 + $0x10] sm:$0xff]
        %v1731 = vld [vmem:[%s5 + $0x18] sm:$0xff]
        %v1732 = vld [vmem:[%s5 + $0x20] sm:$0xff]
        %v1733 = vld [vmem:[%s5 + $0x28] sm:$0xff]
        %v1734 = vld [vmem:[%s5 + $0x30] sm:$0xff]
        %v1735 = vld [vmem:[%s5 + $0x38] sm:$0xff]
        %v1736 = vld [vmem:[%s5 + $0x40] sm:$0xff]
        %v1737 = vld [vmem:[%s5 + $0x48] sm:$0xff]
        %v1738 = vld [vmem:[%s5 + $0x50] sm:$0xff]
        %v1739 = vld [vmem:[%s5 + $0x58] sm:$0xff]
        %v1740 = vld [vmem:[%s5 + $0x60] sm:$0xff]
        %v1741 = vld [vmem:[%s5 + $0x68] sm:$0xff]
        %v1742 = vld [vmem:[%s5 + $0x70] sm:$0xff]
        %v1743 = vld [vmem:[%s5 + $0x78] sm:$0xff]
        %v1744 = vmul.f32 %v1706, %v1728
        %v1745 = vmul.f32 %v1706, %v1729
        %v1746 = vmul.f32 %v1709, %v1730
        %v1747 = vmul.f32 %v1709, %v1731
        %v1748 = vmul.f32 %v1712, %v1732
        %v1749 = vmul.f32 %v1712, %v1733
        %v1750 = vmul.f32 %v1715, %v1734
        %v1751 = vmul.f32 %v1715, %v1735
        %v1752 = vmul.f32 %v1718, %v1736
        %v1753 = vmul.f32 %v1718, %v1737
        %v1754 = vmul.f32 %v1721, %v1738
        %v1755 = vmul.f32 %v1721, %v1739
        %v1756 = vmul.f32 %v1724, %v1740
        %v1757 = vmul.f32 %v1724, %v1741
        %v1758 = vmul.f32 %v1727, %v1742
        %v1759 = vmul.f32 %v1727, %v1743
        %v1760 = vadd.f32 %v1744, %v1746
        %v1761 = vadd.f32 %v1760, %v1748
        %v1762 = vadd.f32 %v1761, %v1750
        %v1763 = vadd.f32 %v1762, %v1752
        %v1764 = vadd.f32 %v1763, %v1754
        %v1765 = vadd.f32 %v1764, %v1756
        %v1766 = vadd.f32 %v1765, %v1758
        %v1767 = vrot.slane %v1766, 4
        %v1768 = vadd.f32 %v1766, %v1767
        %v1769 = vrot.slane %v1768, 2
        %v1770 = vadd.f32 %v1768, %v1769
        %v1771 = vrot.slane %v1770, 1
        %v1772 = vadd.f32 %v1770, %v1771
        %v1773 = vadd.f32 %v1745, %v1747
        %v1774 = vadd.f32 %v1773, %v1749
        %v1775 = vadd.f32 %v1774, %v1751
        %v1776 = vadd.f32 %v1775, %v1753
        %v1777 = vadd.f32 %v1776, %v1755
        %v1778 = vadd.f32 %v1777, %v1757
        %v1779 = vadd.f32 %v1778, %v1759
        %v1780 = vrot.slane %v1779, 4
        %v1781 = vadd.f32 %v1779, %v1780
        %v1782 = vrot.slane %v1781, 2
        %v1783 = vadd.f32 %v1781, %v1782
        %v1784 = vrot.slane %v1783, 1
        %v1785 = vadd.f32 %v1783, %v1784
        %v1786 = vld [vmem:[%s6] sm:$0x3]
        %v1788 = vlaneseq
        %v1789 = vshrl.u32 %v1788, 7
        %v1790 = vsub.s32 0, %v1789
        %v1791 = vrot.slane %v1786, %v1790
        %v1792 = vlaneseq
        %v1793 = vshrl.u32 %v1792, 7
        %v1794 = vsub.s32 1, %v1793
        %v1795 = vrot.slane %v1786, %v1794
        %v1798 = vadd.f32 %v1772, %v1791
        %v1799 = vadd.f32 %v1785, %v1795
        %v1800 = vmax.f32 %v1798, 0.0
        %v1801 = vmax.f32 %v1799, 0.0
        %v1802 = vpack.c.bf16 %v1800, %v1800
        %v1803 = vpack.c.bf16 %v1801, %v1801
        %v1804 = vld [vmem:[#allocation9] sm:$0xff]
        %v1805 = vld [vmem:[#allocation9 + $0x8] sm:$0xff]
        %v1806 = vld [vmem:[#allocation9 + $0x10] sm:$0xff]
        %v1807 = vld [vmem:[#allocation9 + $0x18] sm:$0xff]
        %v1808 = vld [vmem:[#allocation9 + $0x20] sm:$0xff]
        %v1809 = vld [vmem:[#allocation9 + $0x28] sm:$0xff]
        %v1810 = vld [vmem:[#allocation9 + $0x30] sm:$0xff]
        %v1811 = vld [vmem:[#allocation9 + $0x38] sm:$0xff]
        %v1812 = vld [vmem:[#allocation9 + $0x40] sm:$0xff]
        %v1813 = vld [vmem:[#allocation9 + $0x48] sm:$0xff]
        %v1814 = vld [vmem:[#allocation9 + $0x50] sm:$0xff]
        %v1815 = vld [vmem:[#allocation9 + $0x58] sm:$0xff]
        %v1816 = vld [vmem:[#allocation9 + $0x60] sm:$0xff]
        %v1817 = vld [vmem:[#allocation9 + $0x68] sm:$0xff]
        %v1818 = vld [vmem:[#allocation9 + $0x70] sm:$0xff]
        %v1819 = vld [vmem:[#allocation9 + $0x78] sm:$0xff]
        %v1820 = vld [vmem:[#allocation9 + $0x80] sm:$0xff]
        %v1821 = vld [vmem:[#allocation9 + $0x88] sm:$0xff]
        %v1822 = vld [vmem:[#allocation9 + $0x90] sm:$0xff]
        %v1823 = vld [vmem:[#allocation9 + $0x98] sm:$0xff]
        %v1824 = vld [vmem:[#allocation9 + $0xa0] sm:$0xff]
        %v1825 = vld [vmem:[#allocation9 + $0xa8] sm:$0xff]
        %v1826 = vld [vmem:[#allocation9 + $0xb0] sm:$0xff]
        %v1827 = vld [vmem:[#allocation9 + $0xb8] sm:$0xff]
        %v1828 = vld [vmem:[#allocation9 + $0xc0] sm:$0xff]
        %v1829 = vld [vmem:[#allocation9 + $0xc8] sm:$0xff]
        %v1830 = vld [vmem:[#allocation9 + $0xd0] sm:$0xff]
        %v1831 = vld [vmem:[#allocation9 + $0xd8] sm:$0xff]
        %v1832 = vld [vmem:[#allocation9 + $0xe0] sm:$0xff]
        %v1833 = vld [vmem:[#allocation9 + $0xe8] sm:$0xff]
        %v1834 = vld [vmem:[#allocation9 + $0xf0] sm:$0xff]
        %v1835 = vld [vmem:[#allocation9 + $0xf8] sm:$0xff]
        %v1836 = vld [vmem:[%s8] sm:$0x3]
        %v1869 = vunpack.c.l.b16 %v1804
        %v1870 = vunpack.c.h.b16 %v1804
        %v1871 = vunpack.c.l.b16 %v1805
        %v1872 = vunpack.c.h.b16 %v1805
        %v1873 = vunpack.c.l.b16 %v1806
        %v1874 = vunpack.c.h.b16 %v1806
        %v1875 = vunpack.c.l.b16 %v1807
        %v1876 = vunpack.c.h.b16 %v1807
        %v1877 = vunpack.c.l.b16 %v1808
        %v1878 = vunpack.c.h.b16 %v1808
        %v1879 = vunpack.c.l.b16 %v1809
        %v1880 = vunpack.c.h.b16 %v1809
        %v1881 = vunpack.c.l.b16 %v1810
        %v1882 = vunpack.c.h.b16 %v1810
        %v1883 = vunpack.c.l.b16 %v1811
        %v1884 = vunpack.c.h.b16 %v1811
        %v1885 = vunpack.c.l.b16 %v1812
        %v1886 = vunpack.c.h.b16 %v1812
        %v1887 = vunpack.c.l.b16 %v1813
        %v1888 = vunpack.c.h.b16 %v1813
        %v1889 = vunpack.c.l.b16 %v1814
        %v1890 = vunpack.c.h.b16 %v1814
        %v1891 = vunpack.c.l.b16 %v1815
        %v1892 = vunpack.c.h.b16 %v1815
        %v1893 = vunpack.c.l.b16 %v1816
        %v1894 = vunpack.c.h.b16 %v1816
        %v1895 = vunpack.c.l.b16 %v1817
        %v1896 = vunpack.c.h.b16 %v1817
        %v1897 = vunpack.c.l.b16 %v1818
        %v1898 = vunpack.c.h.b16 %v1818
        %v1899 = vunpack.c.l.b16 %v1819
        %v1900 = vunpack.c.h.b16 %v1819
        %v1901 = vunpack.c.l.b16 %v1820
        %v1902 = vunpack.c.h.b16 %v1820
        %v1903 = vunpack.c.l.b16 %v1821
        %v1904 = vunpack.c.h.b16 %v1821
        %v1905 = vunpack.c.l.b16 %v1822
        %v1906 = vunpack.c.h.b16 %v1822
        %v1907 = vunpack.c.l.b16 %v1823
        %v1908 = vunpack.c.h.b16 %v1823
        %v1909 = vunpack.c.l.b16 %v1824
        %v1910 = vunpack.c.h.b16 %v1824
        %v1911 = vunpack.c.l.b16 %v1825
        %v1912 = vunpack.c.h.b16 %v1825
        %v1913 = vunpack.c.l.b16 %v1826
        %v1914 = vunpack.c.h.b16 %v1826
        %v1915 = vunpack.c.l.b16 %v1827
        %v1916 = vunpack.c.h.b16 %v1827
        %v1917 = vunpack.c.l.b16 %v1828
        %v1918 = vunpack.c.h.b16 %v1828
        %v1919 = vunpack.c.l.b16 %v1829
        %v1920 = vunpack.c.h.b16 %v1829
        %v1921 = vunpack.c.l.b16 %v1830
        %v1922 = vunpack.c.h.b16 %v1830
        %v1923 = vunpack.c.l.b16 %v1831
        %v1924 = vunpack.c.h.b16 %v1831
        %v1925 = vunpack.c.l.b16 %v1832
        %v1926 = vunpack.c.h.b16 %v1832
        %v1927 = vunpack.c.l.b16 %v1833
        %v1928 = vunpack.c.h.b16 %v1833
        %v1929 = vunpack.c.l.b16 %v1834
        %v1930 = vunpack.c.h.b16 %v1834
        %v1931 = vunpack.c.l.b16 %v1835
        %v1932 = vunpack.c.h.b16 %v1835
        %v1933 = vpack.c.b16 %v1871, %v1869
        %v1934 = vpack.c.b16 %v1872, %v1870
        %v1935 = vpack.c.b16 %v1875, %v1873
        %v1936 = vpack.c.b16 %v1876, %v1874
        %v1937 = vpack.c.b16 %v1879, %v1877
        %v1938 = vpack.c.b16 %v1880, %v1878
        %v1939 = vpack.c.b16 %v1883, %v1881
        %v1940 = vpack.c.b16 %v1884, %v1882
        %v1941 = vpack.c.b16 %v1887, %v1885
        %v1942 = vpack.c.b16 %v1888, %v1886
        %v1943 = vpack.c.b16 %v1891, %v1889
        %v1944 = vpack.c.b16 %v1892, %v1890
        %v1945 = vpack.c.b16 %v1895, %v1893
        %v1946 = vpack.c.b16 %v1896, %v1894
        %v1947 = vpack.c.b16 %v1899, %v1897
        %v1948 = vpack.c.b16 %v1900, %v1898
        %v1949 = vpack.c.b16 %v1903, %v1901
        %v1950 = vpack.c.b16 %v1904, %v1902
        %v1951 = vpack.c.b16 %v1907, %v1905
        %v1952 = vpack.c.b16 %v1908, %v1906
        %v1953 = vpack.c.b16 %v1911, %v1909
        %v1954 = vpack.c.b16 %v1912, %v1910
        %v1955 = vpack.c.b16 %v1915, %v1913
        %v1956 = vpack.c.b16 %v1916, %v1914
        %v1957 = vpack.c.b16 %v1919, %v1917
        %v1958 = vpack.c.b16 %v1920, %v1918
        %v1959 = vpack.c.b16 %v1923, %v1921
        %v1960 = vpack.c.b16 %v1924, %v1922
        %v1961 = vpack.c.b16 %v1927, %v1925
        %v1962 = vpack.c.b16 %v1928, %v1926
        %v1963 = vpack.c.b16 %v1931, %v1929
        %v1964 = vpack.c.b16 %v1932, %v1930
        %v1998 = vlaneseq
        %v1999 = vshrl.u32 %v1998, 7
        %v2000 = vsub.s32 0, %v1999
        %v2001 = vrot.slane %v1836, %v2000
        %v2002 = vlaneseq
        %v2003 = vshrl.u32 %v2002, 7
        %v2004 = vsub.s32 1, %v2003
        %v2005 = vrot.slane %v1836, %v2004
        %2008 = vmatprep.subr.bf16.mxu0 %v1948
        %2009 = vmatpush1.bf16.msra.mxu0 %v1947
        %2010 = vmatprep.subr.bf16.mxu0 %v1946
        %2011 = vmatpush1.bf16.msra.mxu0 %v1945
        %2012 = vmatprep.subr.bf16.mxu0 %v1944
        %2013 = vmatpush1.bf16.msra.mxu0 %v1943
        %2014 = vmatprep.subr.bf16.mxu0 %v1942
        %2015 = vmatpush1.bf16.msra.mxu0 %v1941
        %2016 = vmatprep.subr.bf16.mxu0 %v1940
        %2017 = vmatpush1.bf16.msra.mxu0 %v1939
        %2018 = vmatprep.subr.bf16.mxu0 %v1938
        %2019 = vmatpush1.bf16.msra.mxu0 %v1937
        %2020 = vmatprep.subr.bf16.mxu0 %v1936
        %2021 = vmatpush1.bf16.msra.mxu0 %v1935
        %2022 = vmatprep.subr.bf16.mxu0 %v1934
        %2023 = vmatpush1.bf16.msra.mxu0 %v1933
        %2024 = vmatprep.subr.bf16.mxu0 %v1964
        %2025 = vmatpush2.bf16.msra.mxu0 %v1963
        %2026 = vmatprep.subr.bf16.mxu0 %v1962
        %2027 = vmatpush2.bf16.msra.mxu0 %v1961
        %2028 = vmatprep.subr.bf16.mxu0 %v1960
        %2029 = vmatpush2.bf16.msra.mxu0 %v1959
        %2030 = vmatprep.subr.bf16.mxu0 %v1958
        %2031 = vmatpush2.bf16.msra.mxu0 %v1957
        %2032 = vmatprep.subr.bf16.mxu0 %v1956
        %2033 = vmatpush2.bf16.msra.mxu0 %v1955
        %2034 = vmatprep.subr.bf16.mxu0 %v1954
        %2035 = vmatpush2.bf16.msra.mxu0 %v1953
        %2036 = vmatprep.subr.bf16.mxu0 %v1952
        %2037 = vmatpush2.bf16.msra.mxu0 %v1951
        %2038 = vmatprep.subr.bf16.mxu0 %v1950
        %2039 = vmatpush2.bf16.msra.mxu0 %v1949
        %2040 = vmatprep.mubr.bf16.mxu0 %v1803
        %2041 = vmatmul.mubr.bf16.gmra.mxu0 %v1802
        %v2042 = vpop.f32.mrf.mxu0
        %v2043 = vadd.f32 %v2001, %v2042
        %v2044 = vpop.f32.mrf.mxu0
        %v2045 = vadd.f32 %v2005, %v2044
        %v2046 = vpop.f32.mrf.mxu0
        %v2047 = vpop.f32.mrf.mxu0
        %2048 = vdwg.mxu0
        %v2049 = vmax.f32 %v2043, 0.0
        %v2050 = vmax.f32 %v2045, 0.0
        %v2051 = vld [vmem:[%s9] sm:$0x3]
        %v2054 = vcombine.low %v2049, %v2050
        %v2056 = vunpack.c.l.s4 1966171168
        %v2057 = vunpack.c.0.s8 %v2056
        %v2058 = vlaneseq
        %v2059 = vshrl.u32 %v2058, 7
        %v2060 = vsub.s32 %v2057, %v2059
        %v2061 = vrot.slane %v2054, %v2060
        %v2063 = vunpack.c.l.s4 1966171168
        %v2064 = vunpack.c.0.s8 %v2063
        %v2065 = vlaneseq
        %v2066 = vshrl.u32 %v2065, 7
        %v2067 = vsub.s32 %v2064, %v2066
        %v2068 = vrot.slane %v2061, %v2067
        %v2070 = vmul.f32 %v2051, %v2068
        %v2072 = vlaneseq
        %v2073 = vshrl.u32 %v2072, 7
        %v2074 = vsub.s32 0, %v2073
        %v2075 = vrot.slane %v2070, %v2074
        %v2076 = vlaneseq
        %v2077 = vshrl.u32 %v2076, 7
        %v2078 = vsub.s32 1, %v2077
        %v2079 = vrot.slane %v2070, %v2078
        %vm2082 = vcmask 1040384
        %v2083 = vsel %vm2082, %v2075, 0.0
        %v2084 = vsel %vm2082, %v2079, 0.0
        %v2085 = vadd.f32 %v2083, %v2084
        %2086 = vadd.xlane.f32.xlu0 %v2085
        %v2087 = vpop.xlane.xlu0 %2086
        %v2088 = vld [vmem:[#allocation4] sm:$0x1]
        %v2089 = vadd.f32 %v2087, %v2088
        %v2090 = vsub.f32 0.0, %v2089
        %v2091 = vmul.f32 %v2090, 1.442695
        %v2092 = vpow.pop %v2091
        %v2093 = vadd.f32 %v2092, 1.0
        %v2094 = vrcp.pop %v2093
        %v2095 = vmul.f32 1.0, %v2094
        %vm2096 = vcmask 0
        %2097 = vst.msk [vmem:[%s425] sm:$0x1] %vm2096, %v2095
        %p2098 = scmp.lt.s32.totalorder %s26, 1
        %s2099 = scalar_select %p2098, %s26, 1
        %s2100 = scalar_lea.vmem %s11, %s2099
        // Predicated region
        $region77: #{forward.1} parent=63 // pred_check
          %p2101 = pneg %p280
        $region78: #{forward.1} parent=63 // pred_check_branch
          %2103 = sbr.rel (%p2101) target = $region80
        $region79: #{forward.1} parent=63 // pred_region
          _
        $region80: #{forward.1} parent=63 // pred_fallthru
          _
      $region64: #{forward.1} parent=5 // pred_fallthru
        _
      %p2104 = scmp.le.s32.totalorder 2, %s21
      // Predicated region
      $region81: #{forward.1} parent=5 // pred_check
        %p2105 = pneg %p2104
      $region82: #{forward.1} parent=5 // pred_check_branch
        %2107 = sbr.rel (%p2105) target = $region84
      $region83: #{forward.1} parent=5 // pred_region
        %s2108 = ssub.s32 %s21, 2
        // Predicated region
        $region85: #{forward.1} parent=83 // pred_check
          %p2109 = pneg %p286
        $region86: #{forward.1} parent=83 // pred_check_branch
          %2111 = sbr.rel (%p2109) target = $region88
        $region87: #{forward.1} parent=83 // pred_region
          %p2112 = scmp.lt.s32.totalorder %s27, 1
          %s2113 = scalar_select %p2112, %s27, 1
          %s2114 = scalar_lea.vmem %s11, %s2113
        $region88: #{forward.1} parent=83 // pred_fallthru
          _
      $region84: #{forward.1} parent=5 // pred_fallthru
        _
    $region6: #{forward.1} parent=1 // loop_footer
      %s25 = sadd.s32 1, %s21
    $region7: #{forward.1} parent=1 // loop_footer_branch
      %20 = sbr.rel target = $region3
    $region8: #{forward.1} parent=1 // loop_exit
      _
    %2115 = vsyncpa [#allocation6], 1
    %s2116 = scalar_lea.sflag [#allocation6], 1
    %2117 = vsyncpa %s2116, 1
    %2118 = vsyncpa [#allocation8], 1

</llo_original>
